<compile_context>
chip_gen: v7x
topology: tpu7x:2x2x1
jax: 0.10.0
libtpu: 0.0.40
codegen_flags: <defaults>
</compile_context>

<pallas_src>
import jax
import jax.numpy as jnp
from jax import lax
from jax.experimental import pallas as pl
from jax.experimental.pallas import tpu as pltpu


# ----------------------------------------------------------------------------
# Fused kernel factory:  bn1 -> relu -> 1x1 conv -> (+b2, relu) -> 3x3 conv (kn2row)
# ----------------------------------------------------------------------------
def _make_dense_layer_kernel(H, W, Cmid, Cout, cdtype):
    C9 = 9 * Cout

    def kernel(x_ref, s1_ref, b1_ref, w1_ref, b2_ref, w2_ref, o_ref, zpad):
        # ---- bn1 -> relu -> 1x1 conv: ONE K=Cin MXU matmul ---------------------------
        x = x_ref[0]                                            # (H*W, Cin)
        a = jnp.maximum(x * s1_ref[...] + b1_ref[...], 0.0)     # f32 elementwise
        y = jnp.dot(a.astype(cdtype), w1_ref[...],
                    preferred_element_type=jnp.float32)         # (H*W, Cmid), bn2-scaled
        act = jnp.maximum(y + b2_ref[...], 0.0)                 # relu(bn2(conv1(.)))

        # ---- 3x3 conv, kn2row: ONE matmul with wide N = 9*Cout -----------------------
        z = jnp.dot(act.astype(cdtype), w2_ref[...],
                    preferred_element_type=jnp.float32)         # (H*W, 9*Cout)

        zd = zpad.dtype
        # zero ONLY the 1-pixel halo ring (interior fully overwritten below)
        zpad[0:1, :, :] = jnp.zeros((1, W + 2, C9), zd)
        zpad[H + 1:H + 2, :, :] = jnp.zeros((1, W + 2, C9), zd)
        zpad[:, 0:1, :] = jnp.zeros((H + 2, 1, C9), zd)
        zpad[:, W + 1:W + 2, :] = jnp.zeros((H + 2, 1, C9), zd)
        zpad[1:H + 1, 1:W + 1, :] = z.reshape(H, W, C9).astype(zd)

        # shift-and-add the 9 tap slabs (static window reads, VPU adds)
        acc = None
        for ky in range(3):
            for kx in range(3):
                t = ky * 3 + kx
                win = zpad[ky:ky + H, kx:kx + W,
                           t * Cout:(t + 1) * Cout].astype(jnp.float32)
                acc = win if acc is None else acc + win

        # ---- lane-dense store: last dim = W*Cout -------------------------------------
        o_ref[...] = acc.reshape(1, H, W * Cout).astype(o_ref.dtype)

    return kernel


# ----------------------------------------------------------------------------
# Channels-last forward (core). inputs_nhwc: list of (N, H, W, Ci) feature maps.
# ----------------------------------------------------------------------------
def dense_layer_forward_nhwc(inputs_nhwc, params, drop_rate=0.0,
                             compute_dtype=jnp.float32, out_dtype=jnp.float32):
    N, H, W, _ = inputs_nhwc[0].shape
    # DenseNet channel concat done once here (the next layer needs the concat anyway) ->
    # single matmul-ready (N, H*W, Cin) input.
    x = jnp.concatenate([t.reshape(N, H * W, t.shape[-1]) for t in inputs_nhwc], axis=-1)
    Cin = x.shape[-1]

    # fold inference BatchNorm into per-channel scale/bias
    eps = 1e-5
    s1 = params["g1"] / jnp.sqrt(params["v1"] + eps)
    b1 = params["beta1"] - params["m1"] * s1
    s2 = params["g2"] / jnp.sqrt(params["v2"] + eps)
    b2 = params["beta2"] - params["m2"] * s2

    # conv1 1x1 weight (Cmid, Cin, 1, 1) -> (Cin, Cmid), bn2 scale folded in
    w1f = (params["w1"][:, :, 0, 0] * s2[:, None]).T.astype(compute_dtype)
    Cmid = w1f.shape[1]
    # conv2 3x3 weight (Cout, Cmid, 3, 3) -> (Cmid, 3, 3, Cout) -> (Cmid, 9*Cout)  [kn2row]
    Cout = params["w2"].shape[0]
    w2f = jnp.transpose(params["w2"], (1, 2, 3, 0)).reshape(Cmid, 9 * Cout)
    w2f = w2f.astype(compute_dtype)

    kernel = _make_dense_layer_kernel(H, W, Cmid, Cout, compute_dtype)

    # VMEM limit sized from actual buffers with headroom, capped for v7x (64 MiB physical)
    itemsize_c = jnp.dtype(compute_dtype).itemsize
    itemsize_o = jnp.dtype(out_dtype).itemsize
    scratch_b = (H + 2) * (W + 2) * 9 * Cout * itemsize_c
    io_b = 2 * (H * W * Cin * x.dtype.itemsize + H * W * Cout * itemsize_o)
    w_b = (2 * Cin + Cin * Cmid + Cmid + Cmid * 9 * Cout) * 4
    live_b = 2 * H * W * (Cin + 2 * Cmid + 9 * Cout) * 4
    vmem_limit = int(min(48 * 2 ** 20,
                         max(32 * 2 ** 20, 2 * (scratch_b + io_b + w_b + live_b))))

    out = pl.pallas_call(
        kernel,
        out_shape=jax.ShapeDtypeStruct((N, H, W * Cout), out_dtype),
        grid_spec=pltpu.PrefetchScalarGridSpec(
            num_scalar_prefetch=0,
            grid=(N,),
            in_specs=[
                pl.BlockSpec((1, H * W, Cin), lambda n: (n, 0, 0)),
                pl.BlockSpec((1, Cin), lambda n: (0, 0)),
                pl.BlockSpec((1, Cin), lambda n: (0, 0)),
                pl.BlockSpec((Cin, Cmid), lambda n: (0, 0)),
                pl.BlockSpec((1, Cmid), lambda n: (0, 0)),
                pl.BlockSpec((Cmid, 9 * Cout), lambda n: (0, 0)),
            ],
            out_specs=pl.BlockSpec((1, H, W * Cout), lambda n: (n, 0, 0)),
            scratch_shapes=[
                pltpu.VMEM((H + 2, W + 2, 9 * Cout), compute_dtype),  # padded kn2row slabs
            ]),
        compiler_params=pltpu.CompilerParams(
            dimension_semantics=("parallel",),
            vmem_limit_bytes=vmem_limit),
    )(x, s1.reshape(1, Cin), b1.reshape(1, Cin), w1f, b2.reshape(1, Cmid), w2f)

    # TODO(synk): training-mode dropout not implemented; eval-mode F.dropout is identity.
    return out.reshape(N, H, W, Cout)          # lane-dense kernel output -> NHWC (free view)


# ----------------------------------------------------------------------------
# NCHW adapter (matches the PyTorch module's interface). In a real channels-last
# pipeline these transposes disappear entirely.
# ----------------------------------------------------------------------------
def dense_layer_forward_nchw(inputs_nchw, params, drop_rate=0.0,
                             compute_dtype=jnp.float32, out_dtype=jnp.float32):
    inputs_nhwc = [jnp.transpose(t, (0, 2, 3, 1)) for t in inputs_nchw]
    out_nhwc = dense_layer_forward_nhwc(inputs_nhwc, params, drop_rate,
                                        compute_dtype, out_dtype)
    return jnp.transpose(out_nhwc, (0, 3, 1, 2))


# ----------------------------------------------------------------------------
# pure-JAX reference (runtime correctness check)
# ----------------------------------------------------------------------------
def dense_layer_reference(inputs_nchw, params):
    eps = 1e-5
    x = jnp.concatenate(inputs_nchw, axis=1)
    bn1 = (x - params["m1"][None, :, None, None]) / jnp.sqrt(
        params["v1"][None, :, None, None] + eps) * params["g1"][None, :, None, None] \
        + params["beta1"][None, :, None, None]
    a1 = jnp.maximum(bn1, 0.0)
    y = lax.conv_general_dilated(a1, params["w1"], (1, 1), "VALID",
                                 dimension_numbers=("NCHW", "OIHW", "NCHW"))
    bn2 = (y - params["m2"][None, :, None, None]) / jnp.sqrt(
        params["v2"][None, :, None, None] + eps) * params["g2"][None, :, None, None] \
        + params["beta2"][None, :, None, None]
    a2 = jnp.maximum(bn2, 0.0)
    z = lax.conv_general_dilated(a2, params["w2"], (1, 1), ((1, 1), (1, 1)),
                                 dimension_numbers=("NCHW", "OIHW", "NCHW"))
    return z


if __name__ == "__main__":
    # module hyperparameters
    num_input_features = 8   # total channels after concat
    growth_rate = 8
    bn_size = 4
    drop_rate = 0.0
    Cmid = bn_size * growth_rate      # 32
    Cout = growth_rate                # 8

    N, H, W = 2, 16, 16

    key = jax.random.PRNGKey(0)
    ks = jax.random.split(key, 12)

    # two prior-layer feature maps, 4 channels each -> concat to 8 (NCHW, like PyTorch)
    x_a = jax.random.normal(ks[0], (N, 4, H, W), jnp.float32)
    x_b = jax.random.normal(ks[1], (N, 4, H, W), jnp.float32)

    params = {
        # BatchNorm2d(num_input_features)
        "g1":    1.0 + 0.1 * jax.random.normal(ks[2], (num_input_features,), jnp.float32),
        "beta1": 0.1 * jax.random.normal(ks[3], (num_input_features,), jnp.float32),
        "m1":    0.1 * jax.random.normal(ks[4], (num_input_features,), jnp.float32),
        "v1":    jnp.abs(jax.random.normal(ks[5], (num_input_features,), jnp.float32)) + 0.5,
        # Conv2d(num_input_features, bn_size*growth_rate, 1, bias=False)
        "w1":    0.2 * jax.random.normal(ks[6], (Cmid, num_input_features, 1, 1), jnp.float32),
        # BatchNorm2d(bn_size*growth_rate)
        "g2":    1.0 + 0.1 * jax.random.normal(ks[7], (Cmid,), jnp.float32),
        "beta2": 0.1 * jax.random.normal(ks[8], (Cmid,), jnp.float32),
        "m2":    0.1 * jax.random.normal(ks[9], (Cmid,), jnp.float32),
        "v2":    jnp.abs(jax.random.normal(ks[10], (Cmid,), jnp.float32)) + 0.5,
        # Conv2d(bn_size*growth_rate, growth_rate, 3, padding=1, bias=False)
        "w2":    0.1 * jax.random.normal(ks[11], (Cout, Cmid, 3, 3), jnp.float32),
    }

    ref = jax.block_until_ready(dense_layer_reference([x_a, x_b], params))

    # f32 MXU operands + f32 scratch: strict correctness check
    out = jax.block_until_ready(
        dense_layer_forward_nchw([x_a, x_b], params, drop_rate))
    assert out.shape == (N, Cout, H, W), out.shape
    assert jnp.allclose(out, ref, atol=1e-3, rtol=1e-3), \
        f"f32 max abs err {float(jnp.max(jnp.abs(out - ref)))}"

    # bf16 MXU operands / bf16 scratch / bf16 output (f32 accumulation everywhere)
    out_bf16 = jax.block_until_ready(
        dense_layer_forward_nchw([x_a, x_b], params, drop_rate,
                                 compute_dtype=jnp.bfloat16, out_dtype=jnp.bfloat16))
    assert jnp.allclose(out_bf16.astype(jnp.float32), ref, atol=1e-1, rtol=1e-1), \
        f"bf16 max abs err {float(jnp.max(jnp.abs(out_bf16.astype(jnp.float32) - ref)))}"

    print("KERNEL_OK")
</pallas_src>

<mosaic_0001>
module attributes {stable_mosaic.version = 11 : i64} {
  func.func @kernel(%arg0: i32, %arg1: memref<1x256x8xf32, #tpu.memory_space<vmem>>, %arg2: memref<1x8xf32, #tpu.memory_space<vmem>>, %arg3: memref<1x8xf32, #tpu.memory_space<vmem>>, %arg4: memref<8x32xf32, #tpu.memory_space<vmem>>, %arg5: memref<1x32xf32, #tpu.memory_space<vmem>>, %arg6: memref<32x72xf32, #tpu.memory_space<vmem>>, %arg7: memref<1x16x128xf32, #tpu.memory_space<vmem>>, %arg8: memref<18x18x72xf32, #tpu.memory_space<vmem>>) attributes {dimension_semantics = [#tpu.dimension_semantics<parallel>], iteration_bounds = array<i64: 2>, scalar_prefetch = 0 : i64, scratch_operands = 1 : i64, tpu.core_type = #tpu.core_type<tc>, window_params = [{transform_indices = @transform_0, window_bounds = array<i64: 1, 256, 8>}, {pipeline_mode = #tpu.pipeline_mode<synchronous>, transform_indices = @transform_1, window_bounds = array<i64: 1, 8>}, {pipeline_mode = #tpu.pipeline_mode<synchronous>, transform_indices = @transform_2, window_bounds = array<i64: 1, 8>}, {pipeline_mode = #tpu.pipeline_mode<synchronous>, transform_indices = @transform_3, window_bounds = array<i64: 8, 32>}, {pipeline_mode = #tpu.pipeline_mode<synchronous>, transform_indices = @transform_4, window_bounds = array<i64: 1, 32>}, {pipeline_mode = #tpu.pipeline_mode<synchronous>, transform_indices = @transform_5, window_bounds = array<i64: 32, 72>}, {transform_indices = @transform_6, window_bounds = array<i64: 1, 16, 128>}]} {
    %c0 = arith.constant 0 : index
    %c0_0 = arith.constant 0 : index
    %c0_1 = arith.constant 0 : index
    %0 = vector.load %arg1[%c0, %c0_0, %c0_1] : memref<1x256x8xf32, #tpu.memory_space<vmem>>, vector<1x256x8xf32>
    %1 = vector.shape_cast %0 : vector<1x256x8xf32> to vector<256x8xf32>
    %c0_2 = arith.constant 0 : index
    %c0_3 = arith.constant 0 : index
    %2 = vector.load %arg2[%c0_2, %c0_3] : memref<1x8xf32, #tpu.memory_space<vmem>>, vector<1x8xf32>
    %3 = vector.broadcast %2 : vector<1x8xf32> to vector<256x8xf32>
    %4 = arith.mulf %1, %3 : vector<256x8xf32>
    %c0_4 = arith.constant 0 : index
    %c0_5 = arith.constant 0 : index
    %5 = vector.load %arg3[%c0_4, %c0_5] : memref<1x8xf32, #tpu.memory_space<vmem>>, vector<1x8xf32>
    %6 = vector.broadcast %5 : vector<1x8xf32> to vector<256x8xf32>
    %7 = arith.addf %4, %6 : vector<256x8xf32>
    %cst = arith.constant 0.000000e+00 : f32
    %8 = vector.broadcast %cst : f32 to vector<256x8xf32>
    %9 = arith.maximumf %7, %8 : vector<256x8xf32>
    %c0_6 = arith.constant 0 : index
    %c0_7 = arith.constant 0 : index
    %10 = vector.load %arg4[%c0_6, %c0_7] : memref<8x32xf32, #tpu.memory_space<vmem>>, vector<8x32xf32>
    %cst_8 = arith.constant dense<0.000000e+00> : vector<256x32xf32>
    %11 = tpu.matmul %9, %10, %cst_8 {dimension_numbers = #tpu.dot_dimension_numbers<[1], [0], [0], [1], [0, 0, 1, 1], [], []>} : vector<256x8xf32>, vector<8x32xf32>, vector<256x32xf32> -> vector<256x32xf32>
    %c0_9 = arith.constant 0 : index
    %c0_10 = arith.constant 0 : index
    %12 = vector.load %arg5[%c0_9, %c0_10] : memref<1x32xf32, #tpu.memory_space<vmem>>, vector<1x32xf32>
    %13 = vector.broadcast %12 : vector<1x32xf32> to vector<256x32xf32>
    %14 = arith.addf %11, %13 : vector<256x32xf32>
    %cst_11 = arith.constant 0.000000e+00 : f32
    %15 = vector.broadcast %cst_11 : f32 to vector<256x32xf32>
    %16 = arith.maximumf %14, %15 : vector<256x32xf32>
    %c0_12 = arith.constant 0 : index
    %c0_13 = arith.constant 0 : index
    %17 = vector.load %arg6[%c0_12, %c0_13] : memref<32x72xf32, #tpu.memory_space<vmem>>, vector<32x72xf32>
    %cst_14 = arith.constant dense<0.000000e+00> : vector<256x72xf32>
    %18 = tpu.matmul %16, %17, %cst_14 {dimension_numbers = #tpu.dot_dimension_numbers<[1], [0], [0], [1], [0, 0, 1, 1], [], []>} : vector<256x32xf32>, vector<32x72xf32>, vector<256x72xf32> -> vector<256x72xf32>
    %cst_15 = arith.constant 0.000000e+00 : f32
    %19 = vector.broadcast %cst_15 : f32 to vector<1x18x72xf32>
    %c0_16 = arith.constant 0 : index
    %c0_17 = arith.constant 0 : index
    %c0_18 = arith.constant 0 : index
    %20 = vector.load %arg8[%c0_16, %c0_17, %c0_18] : memref<18x18x72xf32, #tpu.memory_space<vmem>>, vector<1x18x72xf32>
    tpu.vector_store %arg8[%c0_16, %c0_17, %c0_18], %19 {strides = array<i32>} : memref<18x18x72xf32, #tpu.memory_space<vmem>>, vector<1x18x72xf32>,
    %cst_19 = arith.constant 0.000000e+00 : f32
    %21 = vector.broadcast %cst_19 : f32 to vector<1x18x72xf32>
    %c17 = arith.constant 17 : index
    %c0_20 = arith.constant 0 : index
    %c0_21 = arith.constant 0 : index
    %22 = vector.load %arg8[%c17, %c0_20, %c0_21] : memref<18x18x72xf32, #tpu.memory_space<vmem>>, vector<1x18x72xf32>
    tpu.vector_store %arg8[%c17, %c0_20, %c0_21], %21 {strides = array<i32>} : memref<18x18x72xf32, #tpu.memory_space<vmem>>, vector<1x18x72xf32>,
    %cst_22 = arith.constant 0.000000e+00 : f32
    %23 = vector.broadcast %cst_22 : f32 to vector<18x1x72xf32>
    %c0_23 = arith.constant 0 : index
    %c0_24 = arith.constant 0 : index
    %c0_25 = arith.constant 0 : index
    %24 = vector.load %arg8[%c0_23, %c0_24, %c0_25] : memref<18x18x72xf32, #tpu.memory_space<vmem>>, vector<18x1x72xf32>
    tpu.vector_store %arg8[%c0_23, %c0_24, %c0_25], %23 {strides = array<i32>} : memref<18x18x72xf32, #tpu.memory_space<vmem>>, vector<18x1x72xf32>,
    %cst_26 = arith.constant 0.000000e+00 : f32
    %25 = vector.broadcast %cst_26 : f32 to vector<18x1x72xf32>
    %c0_27 = arith.constant 0 : index
    %c17_28 = arith.constant 17 : index
    %c0_29 = arith.constant 0 : index
    %26 = vector.load %arg8[%c0_27, %c17_28, %c0_29] : memref<18x18x72xf32, #tpu.memory_space<vmem>>, vector<18x1x72xf32>
    tpu.vector_store %arg8[%c0_27, %c17_28, %c0_29], %25 {strides = array<i32>} : memref<18x18x72xf32, #tpu.memory_space<vmem>>, vector<18x1x72xf32>,
    %27 = vector.shape_cast %18 : vector<256x72xf32> to vector<16x16x72xf32>
    %c1 = arith.constant 1 : index
    %c1_30 = arith.constant 1 : index
    %c0_31 = arith.constant 0 : index
    %28 = vector.load %arg8[%c1, %c1_30, %c0_31] : memref<18x18x72xf32, #tpu.memory_space<vmem>>, vector<16x16x72xf32>
    tpu.vector_store %arg8[%c1, %c1_30, %c0_31], %27 {strides = array<i32>} : memref<18x18x72xf32, #tpu.memory_space<vmem>>, vector<16x16x72xf32>,
    %c0_32 = arith.constant 0 : index
    %c0_33 = arith.constant 0 : index
    %c0_34 = arith.constant 0 : index
    %29 = vector.load %arg8[%c0_32, %c0_33, %c0_34] : memref<18x18x72xf32, #tpu.memory_space<vmem>>, vector<16x16x8xf32>
    %c0_35 = arith.constant 0 : index
    %c1_36 = arith.constant 1 : index
    %c8 = arith.constant 8 : index
    %30 = vector.load %arg8[%c0_35, %c1_36, %c8] : memref<18x18x72xf32, #tpu.memory_space<vmem>>, vector<16x16x8xf32>
    %31 = arith.addf %29, %30 : vector<16x16x8xf32>
    %c0_37 = arith.constant 0 : index
    %c2 = arith.constant 2 : index
    %c16 = arith.constant 16 : index
    %32 = vector.load %arg8[%c0_37, %c2, %c16] : memref<18x18x72xf32, #tpu.memory_space<vmem>>, vector<16x16x8xf32>
    %33 = arith.addf %31, %32 : vector<16x16x8xf32>
    %c1_38 = arith.constant 1 : index
    %c0_39 = arith.constant 0 : index
    %c24 = arith.constant 24 : index
    %34 = vector.load %arg8[%c1_38, %c0_39, %c24] : memref<18x18x72xf32, #tpu.memory_space<vmem>>, vector<16x16x8xf32>
    %35 = arith.addf %33, %34 : vector<16x16x8xf32>
    %c1_40 = arith.constant 1 : index
    %c1_41 = arith.constant 1 : index
    %c32 = arith.constant 32 : index
    %36 = vector.load %arg8[%c1_40, %c1_41, %c32] : memref<18x18x72xf32, #tpu.memory_space<vmem>>, vector<16x16x8xf32>
    %37 = arith.addf %35, %36 : vector<16x16x8xf32>
    %c1_42 = arith.constant 1 : index
    %c2_43 = arith.constant 2 : index
    %c40 = arith.constant 40 : index
    %38 = vector.load %arg8[%c1_42, %c2_43, %c40] : memref<18x18x72xf32, #tpu.memory_space<vmem>>, vector<16x16x8xf32>
    %39 = arith.addf %37, %38 : vector<16x16x8xf32>
    %c2_44 = arith.constant 2 : index
    %c0_45 = arith.constant 0 : index
    %c48 = arith.constant 48 : index
    %40 = vector.load %arg8[%c2_44, %c0_45, %c48] : memref<18x18x72xf32, #tpu.memory_space<vmem>>, vector<16x16x8xf32>
    %41 = arith.addf %39, %40 : vector<16x16x8xf32>
    %c2_46 = arith.constant 2 : index
    %c1_47 = arith.constant 1 : index
    %c56 = arith.constant 56 : index
    %42 = vector.load %arg8[%c2_46, %c1_47, %c56] : memref<18x18x72xf32, #tpu.memory_space<vmem>>, vector<16x16x8xf32>
    %43 = arith.addf %41, %42 : vector<16x16x8xf32>
    %c2_48 = arith.constant 2 : index
    %c2_49 = arith.constant 2 : index
    %c64 = arith.constant 64 : index
    %44 = vector.load %arg8[%c2_48, %c2_49, %c64] : memref<18x18x72xf32, #tpu.memory_space<vmem>>, vector<16x16x8xf32>
    %45 = arith.addf %43, %44 : vector<16x16x8xf32>
    %46 = vector.shape_cast %45 : vector<16x16x8xf32> to vector<1x16x128xf32>
    %c0_50 = arith.constant 0 : index
    %c0_51 = arith.constant 0 : index
    %c0_52 = arith.constant 0 : index
    %47 = vector.load %arg7[%c0_50, %c0_51, %c0_52] : memref<1x16x128xf32, #tpu.memory_space<vmem>>, vector<1x16x128xf32>
    tpu.vector_store %arg7[%c0_50, %c0_51, %c0_52], %46 {strides = array<i32>} : memref<1x16x128xf32, #tpu.memory_space<vmem>>, vector<1x16x128xf32>,
    return
  }
  func.func @transform_0(%arg0: i32) -> (i32, i32, i32) {
    %c0_i32 = arith.constant 0 : i32
    %c0_i32_0 = arith.constant 0 : i32
    %c0_i32_1 = arith.constant 0 : i32
    return %arg0, %c0_i32, %c0_i32_0 : i32, i32, i32
  }
  func.func @transform_1(%arg0: i32) -> (i32, i32) {
    %c0_i32 = arith.constant 0 : i32
    %c0_i32_0 = arith.constant 0 : i32
    %c0_i32_1 = arith.constant 0 : i32
    return %c0_i32, %c0_i32_0 : i32, i32
  }
  func.func @transform_2(%arg0: i32) -> (i32, i32) {
    %c0_i32 = arith.constant 0 : i32
    %c0_i32_0 = arith.constant 0 : i32
    %c0_i32_1 = arith.constant 0 : i32
    return %c0_i32, %c0_i32_0 : i32, i32
  }
  func.func @transform_3(%arg0: i32) -> (i32, i32) {
    %c0_i32 = arith.constant 0 : i32
    %c0_i32_0 = arith.constant 0 : i32
    %c0_i32_1 = arith.constant 0 : i32
    return %c0_i32, %c0_i32_0 : i32, i32
  }
  func.func @transform_4(%arg0: i32) -> (i32, i32) {
    %c0_i32 = arith.constant 0 : i32
    %c0_i32_0 = arith.constant 0 : i32
    %c0_i32_1 = arith.constant 0 : i32
    return %c0_i32, %c0_i32_0 : i32, i32
  }
  func.func @transform_5(%arg0: i32) -> (i32, i32) {
    %c0_i32 = arith.constant 0 : i32
    %c0_i32_0 = arith.constant 0 : i32
    %c0_i32_1 = arith.constant 0 : i32
    return %c0_i32, %c0_i32_0 : i32, i32
  }
  func.func @transform_6(%arg0: i32) -> (i32, i32, i32) {
    %c0_i32 = arith.constant 0 : i32
    %c0_i32_0 = arith.constant 0 : i32
    %c0_i32_1 = arith.constant 0 : i32
    return %arg0, %c0_i32, %c0_i32_0 : i32, i32, i32
  }
}

</mosaic_0001>

<llo_original>
// kernel: tpu_custom_call.1
$region0: #{tpu_custom_call.1}
  #allocation0 [shape = 'u32[]', space=smem, size = 0x4, offset = 0x4, fixed_abs, tag = 'smem constant byte address 0x4 - core index']
  #allocation1 [shape = 'u32[144,128]{1,0:T(1,128)}', space=vmem, size = 0x12000, scoped, tag = 'internal scratch']
  #allocation2 [shape = 'f32[18,18,72]{2,1,0:T(8,128)}', space=vmem, size = 0x36000, scoped, tag = 'scratch operand']
  %s0 = inlined_call_operand.vmem [shape: f32[2,256,8], index: 0, kind: input, shape index: {}]
  %s1 = inlined_call_operand.vmem [shape: f32[1,8], index: 1, kind: input, shape index: {}]
  %s2 = inlined_call_operand.vmem [shape: f32[1,8], index: 2, kind: input, shape index: {}]
  %s3 = inlined_call_operand.vmem [shape: f32[8,32], index: 3, kind: input, shape index: {}]
  %s4 = inlined_call_operand.vmem [shape: f32[1,32], index: 4, kind: input, shape index: {}]
  %s5 = inlined_call_operand.vmem [shape: f32[32,72], index: 5, kind: input, shape index: {}]
  %s6 = inlined_call_operand.hbm [shape: f32[2,16,128], index: 6, kind: output, shape index: {}]
  %s7 = sld [smem:[#allocation0]]
  $region57: #{tpu_custom_call.1} parent=0
    _
  %s9 = ssub.s32 1, %s7
  %s10 = scalar_select 0, %s9, %s7
  $region1: #{tpu_custom_call.1} parent=0
    #allocation3 [shape = 'u8[16384]{0}', space=vmem, size = 0x4000, scoped, tag = 'output window, operand 0']
    #allocation4 [shape = 's32[2]{0}', space=sflag, size = 0x8, scoped, tag = 'scoped memory for tpu_custom_call.1']
    %11 = vsyncpa [#allocation4], 0
    %s12 = scalar_lea.sflag [#allocation4], 1
    %13 = vsyncpa %s12, 0
    loop: start=0, step=1, limit=4
    $region2: #{tpu_custom_call.1} parent=1 // loop_pre_header
      _
    $region3: #{tpu_custom_call.1} parent=1 // loop_header
      %s15 = sphi 0, %s19
      %p16 = scmp.ge.s32.totalorder %s15, 4
      %s25 = sphi 0, %s27
      %s28 = sphi 0, %s25
      %s29 = sphi 0, %s28
      %s45 = sphi 0, %s29
      %s49 = sphi 0, %s49
      %s51 = sphi 0, %s49
      %s52 = sphi 0, %s51
      %s66 = sphi 0, %s52
      %s70 = sphi 0, %s70
      %s72 = sphi 0, %s70
      %s73 = sphi 0, %s72
      %s87 = sphi 0, %s73
      %s91 = sphi 0, %s91
      %s93 = sphi 0, %s91
      %s94 = sphi 0, %s93
      %s108 = sphi 0, %s94
      %s112 = sphi 0, %s112
      %s114 = sphi 0, %s112
      %s115 = sphi 0, %s114
      %s129 = sphi 0, %s115
      %s133 = sphi 0, %s133
      %s135 = sphi 0, %s133
      %s136 = sphi 0, %s135
      %s150 = sphi 0, %s136
      %s156 = sphi 0, %s158
      %s159 = sphi 0, %s156
      %s160 = sphi 0, %s159
      %s176 = sphi 0, %s160
    $region4: #{tpu_custom_call.1} parent=1 // loop_header_branch
      %18 = sbr.rel (%p16) target = $region8
    $region5: #{tpu_custom_call.1} parent=1 // loop_body
      %s20 = ssub.s32 %s15, 1
      %s21 = ssub.s32 %s15, 2
      %s22 = sadd.s32 %s15, 1
      %s23 = ssub.s32 %s15, %s22
      %p24 = scmp.eq.s32.totalorder %s23, 0
      %s26 = sadd.s32 %s25, 1
      %s27 = scalar_select %p24, %s25, %s26
      %p30 = pneg %p24
      %p31 = scmp.eq.s32.totalorder %s15, 1
      %p32 = por %p30, %p31
      %p33 = scmp.ne.s32.totalorder %s25, %s28
      %p34 = scmp.eq.s32.totalorder %s15, 0
      %p35 = por %p33, %p34
      %p36 = scmp.ne.s32.totalorder %s25, %s28
      %p37 = scmp.eq.s32.totalorder %s20, 1
      %p38 = por %p36, %p37
      %p39 = scmp.ne.s32.totalorder %s28, %s29
      %p40 = scmp.eq.s32.totalorder %s20, 0
      %p41 = por %p39, %p40
      %p42 = scmp.ne.s32.totalorder %s28, %s29
      %p43 = scmp.eq.s32.totalorder %s21, 1
      %p44 = por %p42, %p43
      %p46 = scmp.ne.s32.totalorder %s29, %s45
      %p47 = scmp.eq.s32.totalorder %s21, 0
      %p48 = por %p46, %p47
      %s50 = sadd.s32 %s49, 1
      %p53 = scmp.eq.s32.totalorder %s15, 1
      %p54 = scmp.ne.s32.totalorder %s49, %s51
      %p55 = scmp.eq.s32.totalorder %s15, 0
      %p56 = por %p54, %p55
      %p57 = scmp.ne.s32.totalorder %s49, %s51
      %p58 = scmp.eq.s32.totalorder %s20, 1
      %p59 = por %p57, %p58
      %p60 = scmp.ne.s32.totalorder %s51, %s52
      %p61 = scmp.eq.s32.totalorder %s20, 0
      %p62 = por %p60, %p61
      %p63 = scmp.ne.s32.totalorder %s51, %s52
      %p64 = scmp.eq.s32.totalorder %s21, 1
      %p65 = por %p63, %p64
      %p67 = scmp.ne.s32.totalorder %s52, %s66
      %p68 = scmp.eq.s32.totalorder %s21, 0
      %p69 = por %p67, %p68
      %s71 = sadd.s32 %s70, 1
      %p74 = scmp.eq.s32.totalorder %s15, 1
      %p75 = scmp.ne.s32.totalorder %s70, %s72
      %p76 = scmp.eq.s32.totalorder %s15, 0
      %p77 = por %p75, %p76
      %p78 = scmp.ne.s32.totalorder %s70, %s72
      %p79 = scmp.eq.s32.totalorder %s20, 1
      %p80 = por %p78, %p79
      %p81 = scmp.ne.s32.totalorder %s72, %s73
      %p82 = scmp.eq.s32.totalorder %s20, 0
      %p83 = por %p81, %p82
      %p84 = scmp.ne.s32.totalorder %s72, %s73
      %p85 = scmp.eq.s32.totalorder %s21, 1
      %p86 = por %p84, %p85
      %p88 = scmp.ne.s32.totalorder %s73, %s87
      %p89 = scmp.eq.s32.totalorder %s21, 0
      %p90 = por %p88, %p89
      %s92 = sadd.s32 %s91, 1
      %p95 = scmp.eq.s32.totalorder %s15, 1
      %p96 = scmp.ne.s32.totalorder %s91, %s93
      %p97 = scmp.eq.s32.totalorder %s15, 0
      %p98 = por %p96, %p97
      %p99 = scmp.ne.s32.totalorder %s91, %s93
      %p100 = scmp.eq.s32.totalorder %s20, 1
      %p101 = por %p99, %p100
      %p102 = scmp.ne.s32.totalorder %s93, %s94
      %p103 = scmp.eq.s32.totalorder %s20, 0
      %p104 = por %p102, %p103
      %p105 = scmp.ne.s32.totalorder %s93, %s94
      %p106 = scmp.eq.s32.totalorder %s21, 1
      %p107 = por %p105, %p106
      %p109 = scmp.ne.s32.totalorder %s94, %s108
      %p110 = scmp.eq.s32.totalorder %s21, 0
      %p111 = por %p109, %p110
      %s113 = sadd.s32 %s112, 1
      %p116 = scmp.eq.s32.totalorder %s15, 1
      %p117 = scmp.ne.s32.totalorder %s112, %s114
      %p118 = scmp.eq.s32.totalorder %s15, 0
      %p119 = por %p117, %p118
      %p120 = scmp.ne.s32.totalorder %s112, %s114
      %p121 = scmp.eq.s32.totalorder %s20, 1
      %p122 = por %p120, %p121
      %p123 = scmp.ne.s32.totalorder %s114, %s115
      %p124 = scmp.eq.s32.totalorder %s20, 0
      %p125 = por %p123, %p124
      %p126 = scmp.ne.s32.totalorder %s114, %s115
      %p127 = scmp.eq.s32.totalorder %s21, 1
      %p128 = por %p126, %p127
      %p130 = scmp.ne.s32.totalorder %s115, %s129
      %p131 = scmp.eq.s32.totalorder %s21, 0
      %p132 = por %p130, %p131
      %s134 = sadd.s32 %s133, 1
      %p137 = scmp.eq.s32.totalorder %s15, 1
      %p138 = scmp.ne.s32.totalorder %s133, %s135
      %p139 = scmp.eq.s32.totalorder %s15, 0
      %p140 = por %p138, %p139
      %p141 = scmp.ne.s32.totalorder %s133, %s135
      %p142 = scmp.eq.s32.totalorder %s20, 1
      %p143 = por %p141, %p142
      %p144 = scmp.ne.s32.totalorder %s135, %s136
      %p145 = scmp.eq.s32.totalorder %s20, 0
      %p146 = por %p144, %p145
      %p147 = scmp.ne.s32.totalorder %s135, %s136
      %p148 = scmp.eq.s32.totalorder %s21, 1
      %p149 = por %p147, %p148
      %p151 = scmp.ne.s32.totalorder %s136, %s150
      %p152 = scmp.eq.s32.totalorder %s21, 0
      %p153 = por %p151, %p152
      %s154 = ssub.s32 %s15, %s22
      %p155 = scmp.eq.s32.totalorder %s154, 0
      %s157 = sadd.s32 %s156, 1
      %s158 = scalar_select %p155, %s156, %s157
      %p161 = pneg %p155
      %p162 = scmp.eq.s32.totalorder %s15, 1
      %p163 = por %p161, %p162
      %p164 = scmp.ne.s32.totalorder %s156, %s159
      %p165 = scmp.eq.s32.totalorder %s15, 0
      %p166 = por %p164, %p165
      %p167 = scmp.ne.s32.totalorder %s156, %s159
      %p168 = scmp.eq.s32.totalorder %s20, 1
      %p169 = por %p167, %p168
      %p170 = scmp.ne.s32.totalorder %s159, %s160
      %p171 = scmp.eq.s32.totalorder %s20, 0
      %p172 = por %p170, %p171
      %p173 = scmp.ne.s32.totalorder %s159, %s160
      %p174 = scmp.eq.s32.totalorder %s21, 1
      %p175 = por %p173, %p174
      %p177 = scmp.ne.s32.totalorder %s160, %s176
      %p178 = scmp.eq.s32.totalorder %s21, 0
      %p179 = por %p177, %p178
      %p180 = scmp.le.s32.totalorder 1, %s15
      %p181 = scmp.lt.s32.totalorder %s15, 3
      %p182 = pnand %p180, %p181
      %p183 = pneg %p182
      // Predicated region
      $region9: #{tpu_custom_call.1} parent=5 // pred_check
        _
      $region10: #{tpu_custom_call.1} parent=5 // pred_check_branch
        %185 = sbr.rel (%p182) target = $region12
      $region11: #{tpu_custom_call.1} parent=5 // pred_region
        %s186 = ssub.s32 %s15, 1
        // Predicated region
        $region13: #{tpu_custom_call.1} parent=11 // pred_check
          %p187 = pneg %p62
        $region14: #{tpu_custom_call.1} parent=11 // pred_check_branch
          %189 = sbr.rel (%p187) target = $region16
        $region15: #{tpu_custom_call.1} parent=11 // pred_region
          _
        $region16: #{tpu_custom_call.1} parent=11 // pred_fallthru
          _
        // Predicated region
        $region17: #{tpu_custom_call.1} parent=11 // pred_check
          %p190 = pneg %p83
        $region18: #{tpu_custom_call.1} parent=11 // pred_check_branch
          %192 = sbr.rel (%p190) target = $region20
        $region19: #{tpu_custom_call.1} parent=11 // pred_region
          _
        $region20: #{tpu_custom_call.1} parent=11 // pred_fallthru
          _
        // Predicated region
        $region21: #{tpu_custom_call.1} parent=11 // pred_check
          %p193 = pneg %p104
        $region22: #{tpu_custom_call.1} parent=11 // pred_check_branch
          %195 = sbr.rel (%p193) target = $region24
        $region23: #{tpu_custom_call.1} parent=11 // pred_region
          _
        $region24: #{tpu_custom_call.1} parent=11 // pred_fallthru
          _
        // Predicated region
        $region25: #{tpu_custom_call.1} parent=11 // pred_check
          %p196 = pneg %p125
        $region26: #{tpu_custom_call.1} parent=11 // pred_check_branch
          %198 = sbr.rel (%p196) target = $region28
        $region27: #{tpu_custom_call.1} parent=11 // pred_region
          _
        $region28: #{tpu_custom_call.1} parent=11 // pred_fallthru
          _
        // Predicated region
        $region29: #{tpu_custom_call.1} parent=11 // pred_check
          %p199 = pneg %p146
        $region30: #{tpu_custom_call.1} parent=11 // pred_check_branch
          %201 = sbr.rel (%p199) target = $region32
        $region31: #{tpu_custom_call.1} parent=11 // pred_region
          _
        $region32: #{tpu_custom_call.1} parent=11 // pred_fallthru
          _
      $region12: #{tpu_custom_call.1} parent=5 // pred_fallthru
        _
      %p202 = scmp.lt.s32.totalorder %s15, 2
      // Predicated region
      $region33: #{tpu_custom_call.1} parent=5 // pred_check
        %p203 = pneg %p202
      $region34: #{tpu_custom_call.1} parent=5 // pred_check_branch
        %205 = sbr.rel (%p203) target = $region36
      $region35: #{tpu_custom_call.1} parent=5 // pred_region
        // Predicated region
        $region37: #{tpu_custom_call.1} parent=35 // pred_check
          %p206 = pneg %p35
        $region38: #{tpu_custom_call.1} parent=35 // pred_check_branch
          %208 = sbr.rel (%p206) target = $region40
        $region39: #{tpu_custom_call.1} parent=35 // pred_region
          %p209 = scmp.lt.s32.totalorder %s15, 1
          %s210 = scalar_select %p209, %s15, 1
          %s211 = smul.addr %s210, 32
          %s212 = smul.addr %s211, 8
          %s213 = scalar_lea.vmem %s0, %s212
        $region40: #{tpu_custom_call.1} parent=35 // pred_fallthru
          _
      $region36: #{tpu_custom_call.1} parent=5 // pred_fallthru
        _
      %p214 = scmp.le.s32.totalorder 1, %s15
      %p215 = scmp.lt.s32.totalorder %s15, 3
      %p216 = pnand %p214, %p215
      %p217 = pneg %p216
      // Predicated region
      $region41: #{tpu_custom_call.1} parent=5 // pred_check
        _
      $region42: #{tpu_custom_call.1} parent=5 // pred_check_branch
        %219 = sbr.rel (%p216) target = $region44
      $region43: #{tpu_custom_call.1} parent=5 // pred_region
        %s220 = ssub.s32 %s15, 1
        %p221 = scmp.lt.s32.totalorder %s20, 1
        %s222 = scalar_select %p221, %s20, 1
        %s223 = smul.addr %s222, 32
        %s224 = smul.addr %s223, 8
        %s225 = scalar_lea.vmem %s0, %s224
        %p226 = pneg %p41
        %p227 = pneg %p38
        %p228 = pneg %p62
        %p229 = pneg %p59
        %p230 = pneg %p83
        %p231 = pneg %p80
        %p232 = pneg %p104
        %p233 = pneg %p101
        %p234 = pneg %p125
        %p235 = pneg %p122
        %p236 = pneg %p146
        %p237 = pneg %p143
        %p238 = pneg %p172
        %p239 = pneg %p169
        %s240 = sand.u32 %s159, 1
        %s241 = scalar_lea.sflag [#allocation4], %s240
        %s242 = sand.u32 %s159, 1
        %s243 = smul.addr %s242, 16
        %s244 = scalar_lea.vmem [#allocation3], %s243
        %p245 = scmp.lt.s32.totalorder %s20, 1
        %s246 = scalar_select %p245, %s20, 1
        %s247 = smul.addr %s246, 32
        %s248 = smul.addr %s247, 8
        %s249 = scalar_lea.vmem %s0, %s248
        %v250 = vld [vmem:[%s249] sm:$0xff]
        %v251 = vld [vmem:[%s249 + $0x8] sm:$0xff]
        %v252 = vld [vmem:[%s249 + $0x10] sm:$0xff]
        %v253 = vld [vmem:[%s249 + $0x18] sm:$0xff]
        %v254 = vld [vmem:[%s249 + $0x20] sm:$0xff]
        %v255 = vld [vmem:[%s249 + $0x28] sm:$0xff]
        %v256 = vld [vmem:[%s249 + $0x30] sm:$0xff]
        %v257 = vld [vmem:[%s249 + $0x38] sm:$0xff]
        %v258 = vld [vmem:[%s249 + $0x40] sm:$0xff]
        %v259 = vld [vmem:[%s249 + $0x48] sm:$0xff]
        %v260 = vld [vmem:[%s249 + $0x50] sm:$0xff]
        %v261 = vld [vmem:[%s249 + $0x58] sm:$0xff]
        %v262 = vld [vmem:[%s249 + $0x60] sm:$0xff]
        %v263 = vld [vmem:[%s249 + $0x68] sm:$0xff]
        %v264 = vld [vmem:[%s249 + $0x70] sm:$0xff]
        %v265 = vld [vmem:[%s249 + $0x78] sm:$0xff]
        %v266 = vld [vmem:[%s249 + $0x80] sm:$0xff]
        %v267 = vld [vmem:[%s249 + $0x88] sm:$0xff]
        %v268 = vld [vmem:[%s249 + $0x90] sm:$0xff]
        %v269 = vld [vmem:[%s249 + $0x98] sm:$0xff]
        %v270 = vld [vmem:[%s249 + $0xa0] sm:$0xff]
        %v271 = vld [vmem:[%s249 + $0xa8] sm:$0xff]
        %v272 = vld [vmem:[%s249 + $0xb0] sm:$0xff]
        %v273 = vld [vmem:[%s249 + $0xb8] sm:$0xff]
        %v274 = vld [vmem:[%s249 + $0xc0] sm:$0xff]
        %v275 = vld [vmem:[%s249 + $0xc8] sm:$0xff]
        %v276 = vld [vmem:[%s249 + $0xd0] sm:$0xff]
        %v277 = vld [vmem:[%s249 + $0xd8] sm:$0xff]
        %v278 = vld [vmem:[%s249 + $0xe0] sm:$0xff]
        %v279 = vld [vmem:[%s249 + $0xe8] sm:$0xff]
        %v280 = vld [vmem:[%s249 + $0xf0] sm:$0xff]
        %v281 = vld [vmem:[%s249 + $0xf8] sm:$0xff]
        %v282 = vld [vmem:[%s1] sm:$0x1]
        %v284 = vlaneseq
        %v285 = vshrl.u32 %v284, 7
        %v286 = vsub.s32 0, %v285
        %v287 = vrot.slane %v282, %v286
        %v289 = vmul.f32 %v250, %v287
        %v290 = vmul.f32 %v251, %v287
        %v291 = vmul.f32 %v252, %v287
        %v292 = vmul.f32 %v253, %v287
        %v293 = vmul.f32 %v254, %v287
        %v294 = vmul.f32 %v255, %v287
        %v295 = vmul.f32 %v256, %v287
        %v296 = vmul.f32 %v257, %v287
        %v297 = vmul.f32 %v258, %v287
        %v298 = vmul.f32 %v259, %v287
        %v299 = vmul.f32 %v260, %v287
        %v300 = vmul.f32 %v261, %v287
        %v301 = vmul.f32 %v262, %v287
        %v302 = vmul.f32 %v263, %v287
        %v303 = vmul.f32 %v264, %v287
        %v304 = vmul.f32 %v265, %v287
        %v305 = vmul.f32 %v266, %v287
        %v306 = vmul.f32 %v267, %v287
        %v307 = vmul.f32 %v268, %v287
        %v308 = vmul.f32 %v269, %v287
        %v309 = vmul.f32 %v270, %v287
        %v310 = vmul.f32 %v271, %v287
        %v311 = vmul.f32 %v272, %v287
        %v312 = vmul.f32 %v273, %v287
        %v313 = vmul.f32 %v274, %v287
        %v314 = vmul.f32 %v275, %v287
        %v315 = vmul.f32 %v276, %v287
        %v316 = vmul.f32 %v277, %v287
        %v317 = vmul.f32 %v278, %v287
        %v318 = vmul.f32 %v279, %v287
        %v319 = vmul.f32 %v280, %v287
        %v320 = vmul.f32 %v281, %v287
        %v321 = vld [vmem:[%s2] sm:$0x1]
        %v323 = vlaneseq
        %v324 = vshrl.u32 %v323, 7
        %v325 = vsub.s32 0, %v324
        %v326 = vrot.slane %v321, %v325
        %v328 = vadd.f32 %v289, %v326
        %v329 = vadd.f32 %v290, %v326
        %v330 = vadd.f32 %v291, %v326
        %v331 = vadd.f32 %v292, %v326
        %v332 = vadd.f32 %v293, %v326
        %v333 = vadd.f32 %v294, %v326
        %v334 = vadd.f32 %v295, %v326
        %v335 = vadd.f32 %v296, %v326
        %v336 = vadd.f32 %v297, %v326
        %v337 = vadd.f32 %v298, %v326
        %v338 = vadd.f32 %v299, %v326
        %v339 = vadd.f32 %v300, %v326
        %v340 = vadd.f32 %v301, %v326
        %v341 = vadd.f32 %v302, %v326
        %v342 = vadd.f32 %v303, %v326
        %v343 = vadd.f32 %v304, %v326
        %v344 = vadd.f32 %v305, %v326
        %v345 = vadd.f32 %v306, %v326
        %v346 = vadd.f32 %v307, %v326
        %v347 = vadd.f32 %v308, %v326
        %v348 = vadd.f32 %v309, %v326
        %v349 = vadd.f32 %v310, %v326
        %v350 = vadd.f32 %v311, %v326
        %v351 = vadd.f32 %v312, %v326
        %v352 = vadd.f32 %v313, %v326
        %v353 = vadd.f32 %v314, %v326
        %v354 = vadd.f32 %v315, %v326
        %v355 = vadd.f32 %v316, %v326
        %v356 = vadd.f32 %v317, %v326
        %v357 = vadd.f32 %v318, %v326
        %v358 = vadd.f32 %v319, %v326
        %v359 = vadd.f32 %v320, %v326
        %v360 = vmax.f32 %v328, 0.0
        %v361 = vmax.f32 %v329, 0.0
        %v362 = vmax.f32 %v330, 0.0
        %v363 = vmax.f32 %v331, 0.0
        %v364 = vmax.f32 %v332, 0.0
        %v365 = vmax.f32 %v333, 0.0
        %v366 = vmax.f32 %v334, 0.0
        %v367 = vmax.f32 %v335, 0.0
        %v368 = vmax.f32 %v336, 0.0
        %v369 = vmax.f32 %v337, 0.0
        %v370 = vmax.f32 %v338, 0.0
        %v371 = vmax.f32 %v339, 0.0
        %v372 = vmax.f32 %v340, 0.0
        %v373 = vmax.f32 %v341, 0.0
        %v374 = vmax.f32 %v342, 0.0
        %v375 = vmax.f32 %v343, 0.0
        %v376 = vmax.f32 %v344, 0.0
        %v377 = vmax.f32 %v345, 0.0
        %v378 = vmax.f32 %v346, 0.0
        %v379 = vmax.f32 %v347, 0.0
        %v380 = vmax.f32 %v348, 0.0
        %v381 = vmax.f32 %v349, 0.0
        %v382 = vmax.f32 %v350, 0.0
        %v383 = vmax.f32 %v351, 0.0
        %v384 = vmax.f32 %v352, 0.0
        %v385 = vmax.f32 %v353, 0.0
        %v386 = vmax.f32 %v354, 0.0
        %v387 = vmax.f32 %v355, 0.0
        %v388 = vmax.f32 %v356, 0.0
        %v389 = vmax.f32 %v357, 0.0
        %v390 = vmax.f32 %v358, 0.0
        %v391 = vmax.f32 %v359, 0.0
        %v392 = vld [vmem:[%s3] sm:$0xff]
        %v393 = vld [vmem:[%s4] sm:$0x1]
        %v395 = vlaneseq
        %v396 = vshrl.u32 %v395, 7
        %v397 = vsub.s32 0, %v396
        %v398 = vrot.slane %v393, %v397
        %vm400 = vcmask 64512
        %v402 = vsel %vm400, %v360, 0
        %v405 = vsel %vm400, %v361, 0
        %v408 = vsel %vm400, %v362, 0
        %v411 = vsel %vm400, %v363, 0
        %v414 = vsel %vm400, %v364, 0
        %v417 = vsel %vm400, %v365, 0
        %v420 = vsel %vm400, %v366, 0
        %v423 = vsel %vm400, %v367, 0
        %v426 = vsel %vm400, %v368, 0
        %v429 = vsel %vm400, %v369, 0
        %v432 = vsel %vm400, %v370, 0
        %v435 = vsel %vm400, %v371, 0
        %v438 = vsel %vm400, %v372, 0
        %v441 = vsel %vm400, %v373, 0
        %v444 = vsel %vm400, %v374, 0
        %v447 = vsel %vm400, %v375, 0
        %v450 = vsel %vm400, %v376, 0
        %v453 = vsel %vm400, %v377, 0
        %v456 = vsel %vm400, %v378, 0
        %v459 = vsel %vm400, %v379, 0
        %v462 = vsel %vm400, %v380, 0
        %v465 = vsel %vm400, %v381, 0
        %v468 = vsel %vm400, %v382, 0
        %v471 = vsel %vm400, %v383, 0
        %v474 = vsel %vm400, %v384, 0
        %v477 = vsel %vm400, %v385, 0
        %v480 = vsel %vm400, %v386, 0
        %v483 = vsel %vm400, %v387, 0
        %v486 = vsel %vm400, %v388, 0
        %v489 = vsel %vm400, %v389, 0
        %v492 = vsel %vm400, %v390, 0
        %v495 = vsel %vm400, %v391, 0
        %497 = vmatprep.subr.mxu0 0.0
        %498 = vmatpush1.msra.mxu0 %v392
        %499 = vmatprep.subr.mxu0 0.0
        %500 = vmatpush1.msra.mxu0 0.0
        %501 = vmatprep.subr.mxu0 0.0
        %502 = vmatpush1.msra.mxu0 0.0
        %503 = vmatprep.subr.mxu0 0.0
        %504 = vmatpush1.msra.mxu0 0.0
        %505 = vmatprep.subr.mxu0 0.0
        %506 = vmatpush1.msra.mxu0 0.0
        %507 = vmatprep.subr.mxu0 0.0
        %508 = vmatpush1.msra.mxu0 0.0
        %509 = vmatprep.subr.mxu0 0.0
        %510 = vmatpush1.msra.mxu0 0.0
        %511 = vmatprep.subr.mxu0 0.0
        %512 = vmatpush1.msra.mxu0 0.0
        %513 = vmatprep.subr.mxu0 0.0
        %514 = vmatpush1.msra.mxu0 0.0
        %515 = vmatprep.subr.mxu0 0.0
        %516 = vmatpush1.msra.mxu0 0.0
        %517 = vmatprep.subr.mxu0 0.0
        %518 = vmatpush1.msra.mxu0 0.0
        %519 = vmatprep.subr.mxu0 0.0
        %520 = vmatpush1.msra.mxu0 0.0
        %521 = vmatprep.subr.mxu0 0.0
        %522 = vmatpush1.msra.mxu0 0.0
        %523 = vmatprep.subr.mxu0 0.0
        %524 = vmatpush1.msra.mxu0 0.0
        %525 = vmatprep.subr.mxu0 0.0
        %526 = vmatpush1.msra.mxu0 0.0
        %527 = vmatprep.subr.mxu0 0.0
        %528 = vmatpush1.msra.mxu0 0.0
        %529 = vmatprep.subr.mxu0 0.0
        %530 = vmatpush1.msra.mxu0 0.0
        %531 = vmatprep.subr.mxu0 0.0
        %532 = vmatpush1.msra.mxu0 0.0
        %533 = vmatprep.subr.mxu0 0.0
        %534 = vmatpush1.msra.mxu0 0.0
        %535 = vmatprep.subr.mxu0 0.0
        %536 = vmatpush1.msra.mxu0 0.0
        %537 = vmatprep.subr.mxu0 0.0
        %538 = vmatpush1.msra.mxu0 0.0
        %539 = vmatprep.subr.mxu0 0.0
        %540 = vmatpush1.msra.mxu0 0.0
        %541 = vmatprep.subr.mxu0 0.0
        %542 = vmatpush1.msra.mxu0 0.0
        %543 = vmatprep.subr.mxu0 0.0
        %544 = vmatpush1.msra.mxu0 0.0
        %545 = vmatprep.subr.mxu0 0.0
        %546 = vmatpush1.msra.mxu0 0.0
        %547 = vmatprep.subr.mxu0 0.0
        %548 = vmatpush1.msra.mxu0 0.0
        %549 = vmatprep.subr.mxu0 0.0
        %550 = vmatpush1.msra.mxu0 0.0
        %551 = vmatprep.subr.mxu0 0.0
        %552 = vmatpush1.msra.mxu0 0.0
        %553 = vmatprep.subr.mxu0 0.0
        %554 = vmatpush1.msra.mxu0 0.0
        %555 = vmatprep.subr.mxu0 0.0
        %556 = vmatpush1.msra.mxu0 0.0
        %557 = vmatprep.subr.mxu0 0.0
        %558 = vmatpush1.msra.mxu0 0.0
        %559 = vmatprep.subr.mxu0 0.0
        %560 = vmatpush1.msra.mxu0 0.0
        %561 = vmatprep.mubr.f32.mxu0 0.0
        %562 = vmatmul.mubr.f32.gmra.mrb[0].mxu0 %v402
        %v563 = vpop.f32.mrb[0].mxu0
        %v564 = vadd.f32 %v398, %v563
        %v565 = vpop.f32.mrb[0].mxu0
        %566 = vmatprep.mubr.f32.mxu0 0.0
        %567 = vmatmul.mubr.f32.gmra.mrb[0].mxu0 %v405
        %v568 = vpop.f32.mrb[0].mxu0
        %v569 = vadd.f32 %v398, %v568
        %v570 = vpop.f32.mrb[0].mxu0
        %571 = vmatprep.mubr.f32.mxu0 0.0
        %572 = vmatmul.mubr.f32.gmra.mrb[0].mxu0 %v408
        %v573 = vpop.f32.mrb[0].mxu0
        %v574 = vadd.f32 %v398, %v573
        %v575 = vpop.f32.mrb[0].mxu0
        %576 = vmatprep.mubr.f32.mxu0 0.0
        %577 = vmatmul.mubr.f32.gmra.mrb[0].mxu0 %v411
        %v578 = vpop.f32.mrb[0].mxu0
        %v579 = vadd.f32 %v398, %v578
        %v580 = vpop.f32.mrb[0].mxu0
        %581 = vmatprep.mubr.f32.mxu0 0.0
        %582 = vmatmul.mubr.f32.gmra.mrb[0].mxu0 %v414
        %v583 = vpop.f32.mrb[0].mxu0
        %v584 = vadd.f32 %v398, %v583
        %v585 = vpop.f32.mrb[0].mxu0
        %586 = vmatprep.mubr.f32.mxu0 0.0
        %587 = vmatmul.mubr.f32.gmra.mrb[0].mxu0 %v417
        %v588 = vpop.f32.mrb[0].mxu0
        %v589 = vadd.f32 %v398, %v588
        %v590 = vpop.f32.mrb[0].mxu0
        %591 = vmatprep.mubr.f32.mxu0 0.0
        %592 = vmatmul.mubr.f32.gmra.mrb[0].mxu0 %v420
        %v593 = vpop.f32.mrb[0].mxu0
        %v594 = vadd.f32 %v398, %v593
        %v595 = vpop.f32.mrb[0].mxu0
        %596 = vmatprep.mubr.f32.mxu0 0.0
        %597 = vmatmul.mubr.f32.gmra.mrb[0].mxu0 %v423
        %v598 = vpop.f32.mrb[0].mxu0
        %v599 = vadd.f32 %v398, %v598
        %v600 = vpop.f32.mrb[0].mxu0
        %601 = vmatprep.mubr.f32.mxu0 0.0
        %602 = vmatmul.mubr.f32.gmra.mrb[0].mxu0 %v426
        %v603 = vpop.f32.mrb[0].mxu0
        %v604 = vadd.f32 %v398, %v603
        %v605 = vpop.f32.mrb[0].mxu0
        %606 = vmatprep.mubr.f32.mxu0 0.0
        %607 = vmatmul.mubr.f32.gmra.mrb[0].mxu0 %v429
        %v608 = vpop.f32.mrb[0].mxu0
        %v609 = vadd.f32 %v398, %v608
        %v610 = vpop.f32.mrb[0].mxu0
        %611 = vmatprep.mubr.f32.mxu0 0.0
        %612 = vmatmul.mubr.f32.gmra.mrb[0].mxu0 %v432
        %v613 = vpop.f32.mrb[0].mxu0
        %v614 = vadd.f32 %v398, %v613
        %v615 = vpop.f32.mrb[0].mxu0
        %616 = vmatprep.mubr.f32.mxu0 0.0
        %617 = vmatmul.mubr.f32.gmra.mrb[0].mxu0 %v435
        %v618 = vpop.f32.mrb[0].mxu0
        %v619 = vadd.f32 %v398, %v618
        %v620 = vpop.f32.mrb[0].mxu0
        %621 = vmatprep.mubr.f32.mxu0 0.0
        %622 = vmatmul.mubr.f32.gmra.mrb[0].mxu0 %v438
        %v623 = vpop.f32.mrb[0].mxu0
        %v624 = vadd.f32 %v398, %v623
        %v625 = vpop.f32.mrb[0].mxu0
        %626 = vmatprep.mubr.f32.mxu0 0.0
        %627 = vmatmul.mubr.f32.gmra.mrb[0].mxu0 %v441
        %v628 = vpop.f32.mrb[0].mxu0
        %v629 = vadd.f32 %v398, %v628
        %v630 = vpop.f32.mrb[0].mxu0
        %631 = vmatprep.mubr.f32.mxu0 0.0
        %632 = vmatmul.mubr.f32.gmra.mrb[0].mxu0 %v444
        %v633 = vpop.f32.mrb[0].mxu0
        %v634 = vadd.f32 %v398, %v633
        %v635 = vpop.f32.mrb[0].mxu0
        %636 = vmatprep.mubr.f32.mxu0 0.0
        %637 = vmatmul.mubr.f32.gmra.mrb[0].mxu0 %v447
        %v638 = vpop.f32.mrb[0].mxu0
        %v639 = vadd.f32 %v398, %v638
        %v640 = vpop.f32.mrb[0].mxu0
        %641 = vmatprep.mubr.f32.mxu0 0.0
        %642 = vmatmul.mubr.f32.gmra.mrb[0].mxu0 %v450
        %v643 = vpop.f32.mrb[0].mxu0
        %v644 = vadd.f32 %v398, %v643
        %v645 = vpop.f32.mrb[0].mxu0
        %646 = vmatprep.mubr.f32.mxu0 0.0
        %647 = vmatmul.mubr.f32.gmra.mrb[0].mxu0 %v453
        %v648 = vpop.f32.mrb[0].mxu0
        %v649 = vadd.f32 %v398, %v648
        %v650 = vpop.f32.mrb[0].mxu0
        %651 = vmatprep.mubr.f32.mxu0 0.0
        %652 = vmatmul.mubr.f32.gmra.mrb[0].mxu0 %v456
        %v653 = vpop.f32.mrb[0].mxu0
        %v654 = vadd.f32 %v398, %v653
        %v655 = vpop.f32.mrb[0].mxu0
        %656 = vmatprep.mubr.f32.mxu0 0.0
        %657 = vmatmul.mubr.f32.gmra.mrb[0].mxu0 %v459
        %v658 = vpop.f32.mrb[0].mxu0
        %v659 = vadd.f32 %v398, %v658
        %v660 = vpop.f32.mrb[0].mxu0
        %661 = vmatprep.mubr.f32.mxu0 0.0
        %662 = vmatmul.mubr.f32.gmra.mrb[0].mxu0 %v462
        %v663 = vpop.f32.mrb[0].mxu0
        %v664 = vadd.f32 %v398, %v663
        %v665 = vpop.f32.mrb[0].mxu0
        %666 = vmatprep.mubr.f32.mxu0 0.0
        %667 = vmatmul.mubr.f32.gmra.mrb[0].mxu0 %v465
        %v668 = vpop.f32.mrb[0].mxu0
        %v669 = vadd.f32 %v398, %v668
        %v670 = vpop.f32.mrb[0].mxu0
        %671 = vmatprep.mubr.f32.mxu0 0.0
        %672 = vmatmul.mubr.f32.gmra.mrb[0].mxu0 %v468
        %v673 = vpop.f32.mrb[0].mxu0
        %v674 = vadd.f32 %v398, %v673
        %v675 = vpop.f32.mrb[0].mxu0
        %676 = vmatprep.mubr.f32.mxu0 0.0
        %677 = vmatmul.mubr.f32.gmra.mrb[0].mxu0 %v471
        %v678 = vpop.f32.mrb[0].mxu0
        %v679 = vadd.f32 %v398, %v678
        %v680 = vpop.f32.mrb[0].mxu0
        %681 = vmatprep.mubr.f32.mxu0 0.0
        %682 = vmatmul.mubr.f32.gmra.mrb[0].mxu0 %v474
        %v683 = vpop.f32.mrb[0].mxu0
        %v684 = vadd.f32 %v398, %v683
        %v685 = vpop.f32.mrb[0].mxu0
        %686 = vmatprep.mubr.f32.mxu0 0.0
        %687 = vmatmul.mubr.f32.gmra.mrb[0].mxu0 %v477
        %v688 = vpop.f32.mrb[0].mxu0
        %v689 = vadd.f32 %v398, %v688
        %v690 = vpop.f32.mrb[0].mxu0
        %691 = vmatprep.mubr.f32.mxu0 0.0
        %692 = vmatmul.mubr.f32.gmra.mrb[0].mxu0 %v480
        %v693 = vpop.f32.mrb[0].mxu0
        %v694 = vadd.f32 %v398, %v693
        %v695 = vpop.f32.mrb[0].mxu0
        %696 = vmatprep.mubr.f32.mxu0 0.0
        %697 = vmatmul.mubr.f32.gmra.mrb[0].mxu0 %v483
        %v698 = vpop.f32.mrb[0].mxu0
        %v699 = vadd.f32 %v398, %v698
        %v700 = vpop.f32.mrb[0].mxu0
        %701 = vmatprep.mubr.f32.mxu0 0.0
        %702 = vmatmul.mubr.f32.gmra.mrb[0].mxu0 %v486
        %v703 = vpop.f32.mrb[0].mxu0
        %v704 = vadd.f32 %v398, %v703
        %v705 = vpop.f32.mrb[0].mxu0
        %706 = vmatprep.mubr.f32.mxu0 0.0
        %707 = vmatmul.mubr.f32.gmra.mrb[0].mxu0 %v489
        %v708 = vpop.f32.mrb[0].mxu0
        %v709 = vadd.f32 %v398, %v708
        %v710 = vpop.f32.mrb[0].mxu0
        %711 = vmatprep.mubr.f32.mxu0 0.0
        %712 = vmatmul.mubr.f32.gmra.mrb[0].mxu0 %v492
        %v713 = vpop.f32.mrb[0].mxu0
        %v714 = vadd.f32 %v398, %v713
        %v715 = vpop.f32.mrb[0].mxu0
        %716 = vmatprep.mubr.f32.mxu0 0.0
        %717 = vmatmul.mubr.f32.gmra.mrb[0].mxu0 %v495
        %v718 = vpop.f32.mrb[0].mxu0
        %v719 = vadd.f32 %v398, %v718
        %v720 = vpop.f32.mrb[0].mxu0
        %721 = vdwg.mxu0
        %v722 = vmax.f32 %v564, 0.0
        %v723 = vmax.f32 %v569, 0.0
        %v724 = vmax.f32 %v574, 0.0
        %v725 = vmax.f32 %v579, 0.0
        %v726 = vmax.f32 %v584, 0.0
        %v727 = vmax.f32 %v589, 0.0
        %v728 = vmax.f32 %v594, 0.0
        %v729 = vmax.f32 %v599, 0.0
        %v730 = vmax.f32 %v604, 0.0
        %v731 = vmax.f32 %v609, 0.0
        %v732 = vmax.f32 %v614, 0.0
        %v733 = vmax.f32 %v619, 0.0
        %v734 = vmax.f32 %v624, 0.0
        %v735 = vmax.f32 %v629, 0.0
        %v736 = vmax.f32 %v634, 0.0
        %v737 = vmax.f32 %v639, 0.0
        %v738 = vmax.f32 %v644, 0.0
        %v739 = vmax.f32 %v649, 0.0
        %v740 = vmax.f32 %v654, 0.0
        %v741 = vmax.f32 %v659, 0.0
        %v742 = vmax.f32 %v664, 0.0
        %v743 = vmax.f32 %v669, 0.0
        %v744 = vmax.f32 %v674, 0.0
        %v745 = vmax.f32 %v679, 0.0
        %v746 = vmax.f32 %v684, 0.0
        %v747 = vmax.f32 %v689, 0.0
        %v748 = vmax.f32 %v694, 0.0
        %v749 = vmax.f32 %v699, 0.0
        %v750 = vmax.f32 %v704, 0.0
        %v751 = vmax.f32 %v709, 0.0
        %v752 = vmax.f32 %v714, 0.0
        %v753 = vmax.f32 %v719, 0.0
        %v754 = vld [vmem:[%s5] sm:$0xff]
        %v755 = vld [vmem:[%s5 + $0x8] sm:$0xff]
        %v756 = vld [vmem:[%s5 + $0x10] sm:$0xff]
        %v757 = vld [vmem:[%s5 + $0x18] sm:$0xff]
        %vm758 = vcmask 261120
        %v760 = vsel %vm758, %v722, 0
        %v763 = vsel %vm758, %v723, 0
        %v766 = vsel %vm758, %v724, 0
        %v769 = vsel %vm758, %v725, 0
        %v772 = vsel %vm758, %v726, 0
        %v775 = vsel %vm758, %v727, 0
        %v778 = vsel %vm758, %v728, 0
        %v781 = vsel %vm758, %v729, 0
        %v784 = vsel %vm758, %v730, 0
        %v787 = vsel %vm758, %v731, 0
        %v790 = vsel %vm758, %v732, 0
        %v793 = vsel %vm758, %v733, 0
        %v796 = vsel %vm758, %v734, 0
        %v799 = vsel %vm758, %v735, 0
        %v802 = vsel %vm758, %v736, 0
        %v805 = vsel %vm758, %v737, 0
        %v808 = vsel %vm758, %v738, 0
        %v811 = vsel %vm758, %v739, 0
        %v814 = vsel %vm758, %v740, 0
        %v817 = vsel %vm758, %v741, 0
        %v820 = vsel %vm758, %v742, 0
        %v823 = vsel %vm758, %v743, 0
        %v826 = vsel %vm758, %v744, 0
        %v829 = vsel %vm758, %v745, 0
        %v832 = vsel %vm758, %v746, 0
        %v835 = vsel %vm758, %v747, 0
        %v838 = vsel %vm758, %v748, 0
        %v841 = vsel %vm758, %v749, 0
        %v844 = vsel %vm758, %v750, 0
        %v847 = vsel %vm758, %v751, 0
        %v850 = vsel %vm758, %v752, 0
        %v853 = vsel %vm758, %v753, 0
        %855 = vmatprep.subr.mxu0 0.0
        %856 = vmatpush1.msra.mxu0 %v754
        %857 = vmatprep.subr.mxu0 0.0
        %858 = vmatpush1.msra.mxu0 %v755
        %859 = vmatprep.subr.mxu0 0.0
        %860 = vmatpush1.msra.mxu0 %v756
        %861 = vmatprep.subr.mxu0 0.0
        %862 = vmatpush1.msra.mxu0 %v757
        %863 = vmatprep.subr.mxu0 0.0
        %864 = vmatpush1.msra.mxu0 0.0
        %865 = vmatprep.subr.mxu0 0.0
        %866 = vmatpush1.msra.mxu0 0.0
        %867 = vmatprep.subr.mxu0 0.0
        %868 = vmatpush1.msra.mxu0 0.0
        %869 = vmatprep.subr.mxu0 0.0
        %870 = vmatpush1.msra.mxu0 0.0
        %871 = vmatprep.subr.mxu0 0.0
        %872 = vmatpush1.msra.mxu0 0.0
        %873 = vmatprep.subr.mxu0 0.0
        %874 = vmatpush1.msra.mxu0 0.0
        %875 = vmatprep.subr.mxu0 0.0
        %876 = vmatpush1.msra.mxu0 0.0
        %877 = vmatprep.subr.mxu0 0.0
        %878 = vmatpush1.msra.mxu0 0.0
        %879 = vmatprep.subr.mxu0 0.0
        %880 = vmatpush1.msra.mxu0 0.0
        %881 = vmatprep.subr.mxu0 0.0
        %882 = vmatpush1.msra.mxu0 0.0
        %883 = vmatprep.subr.mxu0 0.0
        %884 = vmatpush1.msra.mxu0 0.0
        %885 = vmatprep.subr.mxu0 0.0
        %886 = vmatpush1.msra.mxu0 0.0
        %887 = vmatprep.subr.mxu0 0.0
        %888 = vmatpush1.msra.mxu0 0.0
        %889 = vmatprep.subr.mxu0 0.0
        %890 = vmatpush1.msra.mxu0 0.0
        %891 = vmatprep.subr.mxu0 0.0
        %892 = vmatpush1.msra.mxu0 0.0
        %893 = vmatprep.subr.mxu0 0.0
        %894 = vmatpush1.msra.mxu0 0.0
        %895 = vmatprep.subr.mxu0 0.0
        %896 = vmatpush1.msra.mxu0 0.0
        %897 = vmatprep.subr.mxu0 0.0
        %898 = vmatpush1.msra.mxu0 0.0
        %899 = vmatprep.subr.mxu0 0.0
        %900 = vmatpush1.msra.mxu0 0.0
        %901 = vmatprep.subr.mxu0 0.0
        %902 = vmatpush1.msra.mxu0 0.0
        %903 = vmatprep.subr.mxu0 0.0
        %904 = vmatpush1.msra.mxu0 0.0
        %905 = vmatprep.subr.mxu0 0.0
        %906 = vmatpush1.msra.mxu0 0.0
        %907 = vmatprep.subr.mxu0 0.0
        %908 = vmatpush1.msra.mxu0 0.0
        %909 = vmatprep.subr.mxu0 0.0
        %910 = vmatpush1.msra.mxu0 0.0
        %911 = vmatprep.subr.mxu0 0.0
        %912 = vmatpush1.msra.mxu0 0.0
        %913 = vmatprep.subr.mxu0 0.0
        %914 = vmatpush1.msra.mxu0 0.0
        %915 = vmatprep.subr.mxu0 0.0
        %916 = vmatpush1.msra.mxu0 0.0
        %917 = vmatprep.subr.mxu0 0.0
        %918 = vmatpush1.msra.mxu0 0.0
        %919 = vmatprep.mubr.f32.mxu0 0.0
        %920 = vmatmul.mubr.f32.gmra.mrb[0].mxu0 %v760
        %v921 = vpop.f32.mrb[0].mxu0
        %v922 = vadd.f32 0.0, %v921
        %v923 = vpop.f32.mrb[0].mxu0
        %924 = vmatprep.mubr.f32.mxu0 0.0
        %925 = vmatmul.mubr.f32.gmra.mrb[0].mxu0 %v763
        %v926 = vpop.f32.mrb[0].mxu0
        %v927 = vadd.f32 0.0, %v926
        %v928 = vpop.f32.mrb[0].mxu0
        %929 = vmatprep.mubr.f32.mxu0 0.0
        %930 = vmatmul.mubr.f32.gmra.mrb[0].mxu0 %v766
        %v931 = vpop.f32.mrb[0].mxu0
        %v932 = vadd.f32 0.0, %v931
        %v933 = vpop.f32.mrb[0].mxu0
        %934 = vmatprep.mubr.f32.mxu0 0.0
        %935 = vmatmul.mubr.f32.gmra.mrb[0].mxu0 %v769
        %v936 = vpop.f32.mrb[0].mxu0
        %v937 = vadd.f32 0.0, %v936
        %v938 = vpop.f32.mrb[0].mxu0
        %939 = vmatprep.mubr.f32.mxu0 0.0
        %940 = vmatmul.mubr.f32.gmra.mrb[0].mxu0 %v772
        %v941 = vpop.f32.mrb[0].mxu0
        %v942 = vadd.f32 0.0, %v941
        %v943 = vpop.f32.mrb[0].mxu0
        %944 = vmatprep.mubr.f32.mxu0 0.0
        %945 = vmatmul.mubr.f32.gmra.mrb[0].mxu0 %v775
        %v946 = vpop.f32.mrb[0].mxu0
        %v947 = vadd.f32 0.0, %v946
        %v948 = vpop.f32.mrb[0].mxu0
        %949 = vmatprep.mubr.f32.mxu0 0.0
        %950 = vmatmul.mubr.f32.gmra.mrb[0].mxu0 %v778
        %v951 = vpop.f32.mrb[0].mxu0
        %v952 = vadd.f32 0.0, %v951
        %v953 = vpop.f32.mrb[0].mxu0
        %954 = vmatprep.mubr.f32.mxu0 0.0
        %955 = vmatmul.mubr.f32.gmra.mrb[0].mxu0 %v781
        %v956 = vpop.f32.mrb[0].mxu0
        %v957 = vadd.f32 0.0, %v956
        %v958 = vpop.f32.mrb[0].mxu0
        %959 = vmatprep.mubr.f32.mxu0 0.0
        %960 = vmatmul.mubr.f32.gmra.mrb[0].mxu0 %v784
        %v961 = vpop.f32.mrb[0].mxu0
        %v962 = vadd.f32 0.0, %v961
        %v963 = vpop.f32.mrb[0].mxu0
        %964 = vmatprep.mubr.f32.mxu0 0.0
        %965 = vmatmul.mubr.f32.gmra.mrb[0].mxu0 %v787
        %v966 = vpop.f32.mrb[0].mxu0
        %v967 = vadd.f32 0.0, %v966
        %v968 = vpop.f32.mrb[0].mxu0
        %969 = vmatprep.mubr.f32.mxu0 0.0
        %970 = vmatmul.mubr.f32.gmra.mrb[0].mxu0 %v790
        %v971 = vpop.f32.mrb[0].mxu0
        %v972 = vadd.f32 0.0, %v971
        %v973 = vpop.f32.mrb[0].mxu0
        %974 = vmatprep.mubr.f32.mxu0 0.0
        %975 = vmatmul.mubr.f32.gmra.mrb[0].mxu0 %v793
        %v976 = vpop.f32.mrb[0].mxu0
        %v977 = vadd.f32 0.0, %v976
        %v978 = vpop.f32.mrb[0].mxu0
        %979 = vmatprep.mubr.f32.mxu0 0.0
        %980 = vmatmul.mubr.f32.gmra.mrb[0].mxu0 %v796
        %v981 = vpop.f32.mrb[0].mxu0
        %v982 = vadd.f32 0.0, %v981
        %v983 = vpop.f32.mrb[0].mxu0
        %984 = vmatprep.mubr.f32.mxu0 0.0
        %985 = vmatmul.mubr.f32.gmra.mrb[0].mxu0 %v799
        %v986 = vpop.f32.mrb[0].mxu0
        %v987 = vadd.f32 0.0, %v986
        %v988 = vpop.f32.mrb[0].mxu0
        %989 = vmatprep.mubr.f32.mxu0 0.0
        %990 = vmatmul.mubr.f32.gmra.mrb[0].mxu0 %v802
        %v991 = vpop.f32.mrb[0].mxu0
        %v992 = vadd.f32 0.0, %v991
        %v993 = vpop.f32.mrb[0].mxu0
        %994 = vmatprep.mubr.f32.mxu0 0.0
        %995 = vmatmul.mubr.f32.gmra.mrb[0].mxu0 %v805
        %v996 = vpop.f32.mrb[0].mxu0
        %v997 = vadd.f32 0.0, %v996
        %v998 = vpop.f32.mrb[0].mxu0
        %999 = vmatprep.mubr.f32.mxu0 0.0
        %1000 = vmatmul.mubr.f32.gmra.mrb[0].mxu0 %v808
        %v1001 = vpop.f32.mrb[0].mxu0
        %v1002 = vadd.f32 0.0, %v1001
        %v1003 = vpop.f32.mrb[0].mxu0
        %1004 = vmatprep.mubr.f32.mxu0 0.0
        %1005 = vmatmul.mubr.f32.gmra.mrb[0].mxu0 %v811
        %v1006 = vpop.f32.mrb[0].mxu0
        %v1007 = vadd.f32 0.0, %v1006
        %v1008 = vpop.f32.mrb[0].mxu0
        %1009 = vmatprep.mubr.f32.mxu0 0.0
        %1010 = vmatmul.mubr.f32.gmra.mrb[0].mxu0 %v814
        %v1011 = vpop.f32.mrb[0].mxu0
        %v1012 = vadd.f32 0.0, %v1011
        %v1013 = vpop.f32.mrb[0].mxu0
        %1014 = vmatprep.mubr.f32.mxu0 0.0
        %1015 = vmatmul.mubr.f32.gmra.mrb[0].mxu0 %v817
        %v1016 = vpop.f32.mrb[0].mxu0
        %v1017 = vadd.f32 0.0, %v1016
        %v1018 = vpop.f32.mrb[0].mxu0
        %1019 = vmatprep.mubr.f32.mxu0 0.0
        %1020 = vmatmul.mubr.f32.gmra.mrb[0].mxu0 %v820
        %v1021 = vpop.f32.mrb[0].mxu0
        %v1022 = vadd.f32 0.0, %v1021
        %v1023 = vpop.f32.mrb[0].mxu0
        %1024 = vmatprep.mubr.f32.mxu0 0.0
        %1025 = vmatmul.mubr.f32.gmra.mrb[0].mxu0 %v823
        %v1026 = vpop.f32.mrb[0].mxu0
        %v1027 = vadd.f32 0.0, %v1026
        %v1028 = vpop.f32.mrb[0].mxu0
        %1029 = vmatprep.mubr.f32.mxu0 0.0
        %1030 = vmatmul.mubr.f32.gmra.mrb[0].mxu0 %v826
        %v1031 = vpop.f32.mrb[0].mxu0
        %v1032 = vadd.f32 0.0, %v1031
        %v1033 = vpop.f32.mrb[0].mxu0
        %1034 = vmatprep.mubr.f32.mxu0 0.0
        %1035 = vmatmul.mubr.f32.gmra.mrb[0].mxu0 %v829
        %v1036 = vpop.f32.mrb[0].mxu0
        %v1037 = vadd.f32 0.0, %v1036
        %v1038 = vpop.f32.mrb[0].mxu0
        %1039 = vmatprep.mubr.f32.mxu0 0.0
        %1040 = vmatmul.mubr.f32.gmra.mrb[0].mxu0 %v832
        %v1041 = vpop.f32.mrb[0].mxu0
        %v1042 = vadd.f32 0.0, %v1041
        %v1043 = vpop.f32.mrb[0].mxu0
        %1044 = vmatprep.mubr.f32.mxu0 0.0
        %1045 = vmatmul.mubr.f32.gmra.mrb[0].mxu0 %v835
        %v1046 = vpop.f32.mrb[0].mxu0
        %v1047 = vadd.f32 0.0, %v1046
        %v1048 = vpop.f32.mrb[0].mxu0
        %1049 = vmatprep.mubr.f32.mxu0 0.0
        %1050 = vmatmul.mubr.f32.gmra.mrb[0].mxu0 %v838
        %v1051 = vpop.f32.mrb[0].mxu0
        %v1052 = vadd.f32 0.0, %v1051
        %v1053 = vpop.f32.mrb[0].mxu0
        %1054 = vmatprep.mubr.f32.mxu0 0.0
        %1055 = vmatmul.mubr.f32.gmra.mrb[0].mxu0 %v841
        %v1056 = vpop.f32.mrb[0].mxu0
        %v1057 = vadd.f32 0.0, %v1056
        %v1058 = vpop.f32.mrb[0].mxu0
        %1059 = vmatprep.mubr.f32.mxu0 0.0
        %1060 = vmatmul.mubr.f32.gmra.mrb[0].mxu0 %v844
        %v1061 = vpop.f32.mrb[0].mxu0
        %v1062 = vadd.f32 0.0, %v1061
        %v1063 = vpop.f32.mrb[0].mxu0
        %1064 = vmatprep.mubr.f32.mxu0 0.0
        %1065 = vmatmul.mubr.f32.gmra.mrb[0].mxu0 %v847
        %v1066 = vpop.f32.mrb[0].mxu0
        %v1067 = vadd.f32 0.0, %v1066
        %v1068 = vpop.f32.mrb[0].mxu0
        %1069 = vmatprep.mubr.f32.mxu0 0.0
        %1070 = vmatmul.mubr.f32.gmra.mrb[0].mxu0 %v850
        %v1071 = vpop.f32.mrb[0].mxu0
        %v1072 = vadd.f32 0.0, %v1071
        %v1073 = vpop.f32.mrb[0].mxu0
        %1074 = vmatprep.mubr.f32.mxu0 0.0
        %1075 = vmatmul.mubr.f32.gmra.mrb[0].mxu0 %v853
        %v1076 = vpop.f32.mrb[0].mxu0
        %v1077 = vadd.f32 0.0, %v1076
        %v1078 = vpop.f32.mrb[0].mxu0
        %1079 = vdwg.mxu0
        %vm1080 = vcmask 588800
        %1081 = vst.msk [vmem:[#allocation2] sm:$0xff] %vm1080, 0.0
        %1082 = vst.msk [vmem:[#allocation2 + $0x8] sm:$0xff] %vm1080, 0.0
        %vm1083 = vcmask 582656
        %1084 = vst.msk [vmem:[#allocation2 + $0x10] sm:$0x3] %vm1083, 0.0
        %s1085 = scalar_lea.vmem [#allocation2], 408
        %1086 = vst.msk [vmem:[%s1085] sm:$0xff] %vm1080, 0.0
        %1087 = vst.msk [vmem:[%s1085 + $0x8] sm:$0xff] %vm1080, 0.0
        %1088 = vst.msk [vmem:[%s1085 + $0x10] sm:$0x3] %vm1083, 0.0
        %vm1089 = vcmask 581632
        %1090 = vst.msk [vmem:[#allocation2] sm:$0x1] %vm1089, 0.0
        %1091 = vst.msk [vmem:[#allocation2 + $0x18] sm:$0x1] %vm1089, 0.0
        %1092 = vst.msk [vmem:[#allocation2 + $0x30] sm:$0x1] %vm1089, 0.0
        %1093 = vst.msk [vmem:[#allocation2 + $0x48] sm:$0x1] %vm1089, 0.0
        %1094 = vst.msk [vmem:[#allocation2 + $0x60] sm:$0x1] %vm1089, 0.0
        %1095 = vst.msk [vmem:[#allocation2 + $0x78] sm:$0x1] %vm1089, 0.0
        %1096 = vst.msk [vmem:[#allocation2 + $0x90] sm:$0x1] %vm1089, 0.0
        %1097 = vst.msk [vmem:[#allocation2 + $0xa8] sm:$0x1] %vm1089, 0.0
        %1098 = vst.msk [vmem:[#allocation2 + $0xc0] sm:$0x1] %vm1089, 0.0
        %1099 = vst.msk [vmem:[#allocation2 + $0xd8] sm:$0x1] %vm1089, 0.0
        %1100 = vst.msk [vmem:[#allocation2 + $0xf0] sm:$0x1] %vm1089, 0.0
        %1101 = vst.msk [vmem:[#allocation2 + $0x108] sm:$0x1] %vm1089, 0.0
        %1102 = vst.msk [vmem:[#allocation2 + $0x120] sm:$0x1] %vm1089, 0.0
        %1103 = vst.msk [vmem:[#allocation2 + $0x138] sm:$0x1] %vm1089, 0.0
        %1104 = vst.msk [vmem:[#allocation2 + $0x150] sm:$0x1] %vm1089, 0.0
        %1105 = vst.msk [vmem:[#allocation2 + $0x168] sm:$0x1] %vm1089, 0.0
        %1106 = vst.msk [vmem:[#allocation2 + $0x180] sm:$0x1] %vm1089, 0.0
        %1107 = vst.msk [vmem:[#allocation2 + $0x198] sm:$0x1] %vm1089, 0.0
        %1108 = vst.msk [vmem:[#allocation2 + $0x11] sm:$0x1] %vm1089, 0.0
        %1109 = vst.msk [vmem:[#allocation2 + $0x29] sm:$0x1] %vm1089, 0.0
        %1110 = vst.msk [vmem:[#allocation2 + $0x41] sm:$0x1] %vm1089, 0.0
        %1111 = vst.msk [vmem:[#allocation2 + $0x59] sm:$0x1] %vm1089, 0.0
        %1112 = vst.msk [vmem:[#allocation2 + $0x71] sm:$0x1] %vm1089, 0.0
        %1113 = vst.msk [vmem:[#allocation2 + $0x89] sm:$0x1] %vm1089, 0.0
        %1114 = vst.msk [vmem:[#allocation2 + $0xa1] sm:$0x1] %vm1089, 0.0
        %1115 = vst.msk [vmem:[#allocation2 + $0xb9] sm:$0x1] %vm1089, 0.0
        %1116 = vst.msk [vmem:[#allocation2 + $0xd1] sm:$0x1] %vm1089, 0.0
        %1117 = vst.msk [vmem:[#allocation2 + $0xe9] sm:$0x1] %vm1089, 0.0
        %1118 = vst.msk [vmem:[#allocation2 + $0x101] sm:$0x1] %vm1089, 0.0
        %1119 = vst.msk [vmem:[#allocation2 + $0x119] sm:$0x1] %vm1089, 0.0
        %1120 = vst.msk [vmem:[#allocation2 + $0x131] sm:$0x1] %vm1089, 0.0
        %1121 = vst.msk [vmem:[#allocation2 + $0x149] sm:$0x1] %vm1089, 0.0
        %1122 = vst.msk [vmem:[#allocation2 + $0x161] sm:$0x1] %vm1089, 0.0
        %1123 = vst.msk [vmem:[#allocation2 + $0x179] sm:$0x1] %vm1089, 0.0
        %1124 = vst.msk [vmem:[#allocation2 + $0x191] sm:$0x1] %vm1089, 0.0
        %1125 = vst.msk [vmem:[#allocation2 + $0x1a9] sm:$0x1] %vm1089, 0.0
        %s1126 = scalar_lea.vmem [#allocation2], 24
        %1127 = vst.msk [vmem:[%s1126 + $0x1] sm:$0xff] %vm1080, %v922
        %1128 = vst.msk [vmem:[%s1126 + $0x9] sm:$0xff] %vm1080, %v927
        %1129 = vst.msk [vmem:[%s1126 + $0x19] sm:$0xff] %vm1080, %v932
        %1130 = vst.msk [vmem:[%s1126 + $0x21] sm:$0xff] %vm1080, %v937
        %1131 = vst.msk [vmem:[%s1126 + $0x31] sm:$0xff] %vm1080, %v942
        %1132 = vst.msk [vmem:[%s1126 + $0x39] sm:$0xff] %vm1080, %v947
        %1133 = vst.msk [vmem:[%s1126 + $0x49] sm:$0xff] %vm1080, %v952
        %1134 = vst.msk [vmem:[%s1126 + $0x51] sm:$0xff] %vm1080, %v957
        %1135 = vst.msk [vmem:[%s1126 + $0x61] sm:$0xff] %vm1080, %v962
        %1136 = vst.msk [vmem:[%s1126 + $0x69] sm:$0xff] %vm1080, %v967
        %1137 = vst.msk [vmem:[%s1126 + $0x79] sm:$0xff] %vm1080, %v972
        %1138 = vst.msk [vmem:[%s1126 + $0x81] sm:$0xff] %vm1080, %v977
        %1139 = vst.msk [vmem:[%s1126 + $0x91] sm:$0xff] %vm1080, %v982
        %1140 = vst.msk [vmem:[%s1126 + $0x99] sm:$0xff] %vm1080, %v987
        %1141 = vst.msk [vmem:[%s1126 + $0xa9] sm:$0xff] %vm1080, %v992
        %1142 = vst.msk [vmem:[%s1126 + $0xb1] sm:$0xff] %vm1080, %v997
        %1143 = vst.msk [vmem:[%s1126 + $0xc1] sm:$0xff] %vm1080, %v1002
        %1144 = vst.msk [vmem:[%s1126 + $0xc9] sm:$0xff] %vm1080, %v1007
        %1145 = vst.msk [vmem:[%s1126 + $0xd9] sm:$0xff] %vm1080, %v1012
        %1146 = vst.msk [vmem:[%s1126 + $0xe1] sm:$0xff] %vm1080, %v1017
        %1147 = vst.msk [vmem:[%s1126 + $0xf1] sm:$0xff] %vm1080, %v1022
        %1148 = vst.msk [vmem:[%s1126 + $0xf9] sm:$0xff] %vm1080, %v1027
        %1149 = vst.msk [vmem:[%s1126 + $0x109] sm:$0xff] %vm1080, %v1032
        %1150 = vst.msk [vmem:[%s1126 + $0x111] sm:$0xff] %vm1080, %v1037
        %1151 = vst.msk [vmem:[%s1126 + $0x121] sm:$0xff] %vm1080, %v1042
        %1152 = vst.msk [vmem:[%s1126 + $0x129] sm:$0xff] %vm1080, %v1047
        %1153 = vst.msk [vmem:[%s1126 + $0x139] sm:$0xff] %vm1080, %v1052
        %1154 = vst.msk [vmem:[%s1126 + $0x141] sm:$0xff] %vm1080, %v1057
        %1155 = vst.msk [vmem:[%s1126 + $0x151] sm:$0xff] %vm1080, %v1062
        %1156 = vst.msk [vmem:[%s1126 + $0x159] sm:$0xff] %vm1080, %v1067
        %1157 = vst.msk [vmem:[%s1126 + $0x169] sm:$0xff] %vm1080, %v1072
        %1158 = vst.msk [vmem:[%s1126 + $0x171] sm:$0xff] %vm1080, %v1077
        %v1159 = vld [vmem:[#allocation2] sm:$0xff]
        %v1160 = vld [vmem:[#allocation2 + $0x8] sm:$0xff]
        %v1161 = vld [vmem:[#allocation2 + $0x18] sm:$0xff]
        %v1162 = vld [vmem:[#allocation2 + $0x20] sm:$0xff]
        %v1163 = vld [vmem:[#allocation2 + $0x30] sm:$0xff]
        %v1164 = vld [vmem:[#allocation2 + $0x38] sm:$0xff]
        %v1165 = vld [vmem:[#allocation2 + $0x48] sm:$0xff]
        %v1166 = vld [vmem:[#allocation2 + $0x50] sm:$0xff]
        %v1167 = vld [vmem:[#allocation2 + $0x60] sm:$0xff]
        %v1168 = vld [vmem:[#allocation2 + $0x68] sm:$0xff]
        %v1169 = vld [vmem:[#allocation2 + $0x78] sm:$0xff]
        %v1170 = vld [vmem:[#allocation2 + $0x80] sm:$0xff]
        %v1171 = vld [vmem:[#allocation2 + $0x90] sm:$0xff]
        %v1172 = vld [vmem:[#allocation2 + $0x98] sm:$0xff]
        %v1173 = vld [vmem:[#allocation2 + $0xa8] sm:$0xff]
        %v1174 = vld [vmem:[#allocation2 + $0xb0] sm:$0xff]
        %v1175 = vld [vmem:[#allocation2 + $0xc0] sm:$0xff]
        %v1176 = vld [vmem:[#allocation2 + $0xc8] sm:$0xff]
        %v1177 = vld [vmem:[#allocation2 + $0xd8] sm:$0xff]
        %v1178 = vld [vmem:[#allocation2 + $0xe0] sm:$0xff]
        %v1179 = vld [vmem:[#allocation2 + $0xf0] sm:$0xff]
        %v1180 = vld [vmem:[#allocation2 + $0xf8] sm:$0xff]
        %v1181 = vld [vmem:[#allocation2 + $0x108] sm:$0xff]
        %v1182 = vld [vmem:[#allocation2 + $0x110] sm:$0xff]
        %v1183 = vld [vmem:[#allocation2 + $0x120] sm:$0xff]
        %v1184 = vld [vmem:[#allocation2 + $0x128] sm:$0xff]
        %v1185 = vld [vmem:[#allocation2 + $0x138] sm:$0xff]
        %v1186 = vld [vmem:[#allocation2 + $0x140] sm:$0xff]
        %v1187 = vld [vmem:[#allocation2 + $0x150] sm:$0xff]
        %v1188 = vld [vmem:[#allocation2 + $0x158] sm:$0xff]
        %v1189 = vld [vmem:[#allocation2 + $0x168] sm:$0xff]
        %v1190 = vld [vmem:[#allocation2 + $0x170] sm:$0xff]
        %v1191 = vld [vmem:[#allocation2 + $0x1] sm:$0xff]
        %v1192 = vld [vmem:[#allocation2 + $0x9] sm:$0xff]
        %v1193 = vld [vmem:[#allocation2 + $0x19] sm:$0xff]
        %v1194 = vld [vmem:[#allocation2 + $0x21] sm:$0xff]
        %v1195 = vld [vmem:[#allocation2 + $0x31] sm:$0xff]
        %v1196 = vld [vmem:[#allocation2 + $0x39] sm:$0xff]
        %v1197 = vld [vmem:[#allocation2 + $0x49] sm:$0xff]
        %v1198 = vld [vmem:[#allocation2 + $0x51] sm:$0xff]
        %v1199 = vld [vmem:[#allocation2 + $0x61] sm:$0xff]
        %v1200 = vld [vmem:[#allocation2 + $0x69] sm:$0xff]
        %v1201 = vld [vmem:[#allocation2 + $0x79] sm:$0xff]
        %v1202 = vld [vmem:[#allocation2 + $0x81] sm:$0xff]
        %v1203 = vld [vmem:[#allocation2 + $0x91] sm:$0xff]
        %v1204 = vld [vmem:[#allocation2 + $0x99] sm:$0xff]
        %v1205 = vld [vmem:[#allocation2 + $0xa9] sm:$0xff]
        %v1206 = vld [vmem:[#allocation2 + $0xb1] sm:$0xff]
        %v1207 = vld [vmem:[#allocation2 + $0xc1] sm:$0xff]
        %v1208 = vld [vmem:[#allocation2 + $0xc9] sm:$0xff]
        %v1209 = vld [vmem:[#allocation2 + $0xd9] sm:$0xff]
        %v1210 = vld [vmem:[#allocation2 + $0xe1] sm:$0xff]
        %v1211 = vld [vmem:[#allocation2 + $0xf1] sm:$0xff]
        %v1212 = vld [vmem:[#allocation2 + $0xf9] sm:$0xff]
        %v1213 = vld [vmem:[#allocation2 + $0x109] sm:$0xff]
        %v1214 = vld [vmem:[#allocation2 + $0x111] sm:$0xff]
        %v1215 = vld [vmem:[#allocation2 + $0x121] sm:$0xff]
        %v1216 = vld [vmem:[#allocation2 + $0x129] sm:$0xff]
        %v1217 = vld [vmem:[#allocation2 + $0x139] sm:$0xff]
        %v1218 = vld [vmem:[#allocation2 + $0x141] sm:$0xff]
        %v1219 = vld [vmem:[#allocation2 + $0x151] sm:$0xff]
        %v1220 = vld [vmem:[#allocation2 + $0x159] sm:$0xff]
        %v1221 = vld [vmem:[#allocation2 + $0x169] sm:$0xff]
        %v1222 = vld [vmem:[#allocation2 + $0x171] sm:$0xff]
        %1255 = vrot.lane.b32.xlu0 %v1191, 120
        %v1256 = vpop.permute.xlu0 %1255
        %1257 = vrot.lane.b32.xlu0 %v1192, 120
        %v1258 = vpop.permute.xlu0 %1257
        %1259 = vrot.lane.b32.xlu0 %v1193, 120
        %v1260 = vpop.permute.xlu0 %1259
        %1261 = vrot.lane.b32.xlu0 %v1194, 120
        %v1262 = vpop.permute.xlu0 %1261
        %1263 = vrot.lane.b32.xlu0 %v1195, 120
        %v1264 = vpop.permute.xlu0 %1263
        %1265 = vrot.lane.b32.xlu0 %v1196, 120
        %v1266 = vpop.permute.xlu0 %1265
        %1267 = vrot.lane.b32.xlu0 %v1197, 120
        %v1268 = vpop.permute.xlu0 %1267
        %1269 = vrot.lane.b32.xlu0 %v1198, 120
        %v1270 = vpop.permute.xlu0 %1269
        %1271 = vrot.lane.b32.xlu0 %v1199, 120
        %v1272 = vpop.permute.xlu0 %1271
        %1273 = vrot.lane.b32.xlu0 %v1200, 120
        %v1274 = vpop.permute.xlu0 %1273
        %1275 = vrot.lane.b32.xlu0 %v1201, 120
        %v1276 = vpop.permute.xlu0 %1275
        %1277 = vrot.lane.b32.xlu0 %v1202, 120
        %v1278 = vpop.permute.xlu0 %1277
        %1279 = vrot.lane.b32.xlu0 %v1203, 120
        %v1280 = vpop.permute.xlu0 %1279
        %1281 = vrot.lane.b32.xlu0 %v1204, 120
        %v1282 = vpop.permute.xlu0 %1281
        %1283 = vrot.lane.b32.xlu0 %v1205, 120
        %v1284 = vpop.permute.xlu0 %1283
        %1285 = vrot.lane.b32.xlu0 %v1206, 120
        %v1286 = vpop.permute.xlu0 %1285
        %1287 = vrot.lane.b32.xlu0 %v1207, 120
        %v1288 = vpop.permute.xlu0 %1287
        %1289 = vrot.lane.b32.xlu0 %v1208, 120
        %v1290 = vpop.permute.xlu0 %1289
        %1291 = vrot.lane.b32.xlu0 %v1209, 120
        %v1292 = vpop.permute.xlu0 %1291
        %1293 = vrot.lane.b32.xlu0 %v1210, 120
        %v1294 = vpop.permute.xlu0 %1293
        %1295 = vrot.lane.b32.xlu0 %v1211, 120
        %v1296 = vpop.permute.xlu0 %1295
        %1297 = vrot.lane.b32.xlu0 %v1212, 120
        %v1298 = vpop.permute.xlu0 %1297
        %1299 = vrot.lane.b32.xlu0 %v1213, 120
        %v1300 = vpop.permute.xlu0 %1299
        %1301 = vrot.lane.b32.xlu0 %v1214, 120
        %v1302 = vpop.permute.xlu0 %1301
        %1303 = vrot.lane.b32.xlu0 %v1215, 120
        %v1304 = vpop.permute.xlu0 %1303
        %1305 = vrot.lane.b32.xlu0 %v1216, 120
        %v1306 = vpop.permute.xlu0 %1305
        %1307 = vrot.lane.b32.xlu0 %v1217, 120
        %v1308 = vpop.permute.xlu0 %1307
        %1309 = vrot.lane.b32.xlu0 %v1218, 120
        %v1310 = vpop.permute.xlu0 %1309
        %1311 = vrot.lane.b32.xlu0 %v1219, 120
        %v1312 = vpop.permute.xlu0 %1311
        %1313 = vrot.lane.b32.xlu0 %v1220, 120
        %v1314 = vpop.permute.xlu0 %1313
        %1315 = vrot.lane.b32.xlu0 %v1221, 120
        %v1316 = vpop.permute.xlu0 %1315
        %1317 = vrot.lane.b32.xlu0 %v1222, 120
        %v1318 = vpop.permute.xlu0 %1317
        %v1351 = vadd.f32 %v1159, %v1256
        %v1352 = vadd.f32 %v1160, %v1258
        %v1353 = vadd.f32 %v1161, %v1260
        %v1354 = vadd.f32 %v1162, %v1262
        %v1355 = vadd.f32 %v1163, %v1264
        %v1356 = vadd.f32 %v1164, %v1266
        %v1357 = vadd.f32 %v1165, %v1268
        %v1358 = vadd.f32 %v1166, %v1270
        %v1359 = vadd.f32 %v1167, %v1272
        %v1360 = vadd.f32 %v1168, %v1274
        %v1361 = vadd.f32 %v1169, %v1276
        %v1362 = vadd.f32 %v1170, %v1278
        %v1363 = vadd.f32 %v1171, %v1280
        %v1364 = vadd.f32 %v1172, %v1282
        %v1365 = vadd.f32 %v1173, %v1284
        %v1366 = vadd.f32 %v1174, %v1286
        %v1367 = vadd.f32 %v1175, %v1288
        %v1368 = vadd.f32 %v1176, %v1290
        %v1369 = vadd.f32 %v1177, %v1292
        %v1370 = vadd.f32 %v1178, %v1294
        %v1371 = vadd.f32 %v1179, %v1296
        %v1372 = vadd.f32 %v1180, %v1298
        %v1373 = vadd.f32 %v1181, %v1300
        %v1374 = vadd.f32 %v1182, %v1302
        %v1375 = vadd.f32 %v1183, %v1304
        %v1376 = vadd.f32 %v1184, %v1306
        %v1377 = vadd.f32 %v1185, %v1308
        %v1378 = vadd.f32 %v1186, %v1310
        %v1379 = vadd.f32 %v1187, %v1312
        %v1380 = vadd.f32 %v1188, %v1314
        %v1381 = vadd.f32 %v1189, %v1316
        %v1382 = vadd.f32 %v1190, %v1318
        %v1383 = vld [vmem:[#allocation2 + $0x2] sm:$0xff]
        %v1384 = vld [vmem:[#allocation2 + $0xa] sm:$0xff]
        %v1385 = vld [vmem:[#allocation2 + $0x1a] sm:$0xff]
        %v1386 = vld [vmem:[#allocation2 + $0x22] sm:$0xff]
        %v1387 = vld [vmem:[#allocation2 + $0x32] sm:$0xff]
        %v1388 = vld [vmem:[#allocation2 + $0x3a] sm:$0xff]
        %v1389 = vld [vmem:[#allocation2 + $0x4a] sm:$0xff]
        %v1390 = vld [vmem:[#allocation2 + $0x52] sm:$0xff]
        %v1391 = vld [vmem:[#allocation2 + $0x62] sm:$0xff]
        %v1392 = vld [vmem:[#allocation2 + $0x6a] sm:$0xff]
        %v1393 = vld [vmem:[#allocation2 + $0x7a] sm:$0xff]
        %v1394 = vld [vmem:[#allocation2 + $0x82] sm:$0xff]
        %v1395 = vld [vmem:[#allocation2 + $0x92] sm:$0xff]
        %v1396 = vld [vmem:[#allocation2 + $0x9a] sm:$0xff]
        %v1397 = vld [vmem:[#allocation2 + $0xaa] sm:$0xff]
        %v1398 = vld [vmem:[#allocation2 + $0xb2] sm:$0xff]
        %v1399 = vld [vmem:[#allocation2 + $0xc2] sm:$0xff]
        %v1400 = vld [vmem:[#allocation2 + $0xca] sm:$0xff]
        %v1401 = vld [vmem:[#allocation2 + $0xda] sm:$0xff]
        %v1402 = vld [vmem:[#allocation2 + $0xe2] sm:$0xff]
        %v1403 = vld [vmem:[#allocation2 + $0xf2] sm:$0xff]
        %v1404 = vld [vmem:[#allocation2 + $0xfa] sm:$0xff]
        %v1405 = vld [vmem:[#allocation2 + $0x10a] sm:$0xff]
        %v1406 = vld [vmem:[#allocation2 + $0x112] sm:$0xff]
        %v1407 = vld [vmem:[#allocation2 + $0x122] sm:$0xff]
        %v1408 = vld [vmem:[#allocation2 + $0x12a] sm:$0xff]
        %v1409 = vld [vmem:[#allocation2 + $0x13a] sm:$0xff]
        %v1410 = vld [vmem:[#allocation2 + $0x142] sm:$0xff]
        %v1411 = vld [vmem:[#allocation2 + $0x152] sm:$0xff]
        %v1412 = vld [vmem:[#allocation2 + $0x15a] sm:$0xff]
        %v1413 = vld [vmem:[#allocation2 + $0x16a] sm:$0xff]
        %v1414 = vld [vmem:[#allocation2 + $0x172] sm:$0xff]
        %1447 = vrot.lane.b32.xlu0 %v1383, 112
        %v1448 = vpop.permute.xlu0 %1447
        %1449 = vrot.lane.b32.xlu0 %v1384, 112
        %v1450 = vpop.permute.xlu0 %1449
        %1451 = vrot.lane.b32.xlu0 %v1385, 112
        %v1452 = vpop.permute.xlu0 %1451
        %1453 = vrot.lane.b32.xlu0 %v1386, 112
        %v1454 = vpop.permute.xlu0 %1453
        %1455 = vrot.lane.b32.xlu0 %v1387, 112
        %v1456 = vpop.permute.xlu0 %1455
        %1457 = vrot.lane.b32.xlu0 %v1388, 112
        %v1458 = vpop.permute.xlu0 %1457
        %1459 = vrot.lane.b32.xlu0 %v1389, 112
        %v1460 = vpop.permute.xlu0 %1459
        %1461 = vrot.lane.b32.xlu0 %v1390, 112
        %v1462 = vpop.permute.xlu0 %1461
        %1463 = vrot.lane.b32.xlu0 %v1391, 112
        %v1464 = vpop.permute.xlu0 %1463
        %1465 = vrot.lane.b32.xlu0 %v1392, 112
        %v1466 = vpop.permute.xlu0 %1465
        %1467 = vrot.lane.b32.xlu0 %v1393, 112
        %v1468 = vpop.permute.xlu0 %1467
        %1469 = vrot.lane.b32.xlu0 %v1394, 112
        %v1470 = vpop.permute.xlu0 %1469
        %1471 = vrot.lane.b32.xlu0 %v1395, 112
        %v1472 = vpop.permute.xlu0 %1471
        %1473 = vrot.lane.b32.xlu0 %v1396, 112
        %v1474 = vpop.permute.xlu0 %1473
        %1475 = vrot.lane.b32.xlu0 %v1397, 112
        %v1476 = vpop.permute.xlu0 %1475
        %1477 = vrot.lane.b32.xlu0 %v1398, 112
        %v1478 = vpop.permute.xlu0 %1477
        %1479 = vrot.lane.b32.xlu0 %v1399, 112
        %v1480 = vpop.permute.xlu0 %1479
        %1481 = vrot.lane.b32.xlu0 %v1400, 112
        %v1482 = vpop.permute.xlu0 %1481
        %1483 = vrot.lane.b32.xlu0 %v1401, 112
        %v1484 = vpop.permute.xlu0 %1483
        %1485 = vrot.lane.b32.xlu0 %v1402, 112
        %v1486 = vpop.permute.xlu0 %1485
        %1487 = vrot.lane.b32.xlu0 %v1403, 112
        %v1488 = vpop.permute.xlu0 %1487
        %1489 = vrot.lane.b32.xlu0 %v1404, 112
        %v1490 = vpop.permute.xlu0 %1489
        %1491 = vrot.lane.b32.xlu0 %v1405, 112
        %v1492 = vpop.permute.xlu0 %1491
        %1493 = vrot.lane.b32.xlu0 %v1406, 112
        %v1494 = vpop.permute.xlu0 %1493
        %1495 = vrot.lane.b32.xlu0 %v1407, 112
        %v1496 = vpop.permute.xlu0 %1495
        %1497 = vrot.lane.b32.xlu0 %v1408, 112
        %v1498 = vpop.permute.xlu0 %1497
        %1499 = vrot.lane.b32.xlu0 %v1409, 112
        %v1500 = vpop.permute.xlu0 %1499
        %1501 = vrot.lane.b32.xlu0 %v1410, 112
        %v1502 = vpop.permute.xlu0 %1501
        %1503 = vrot.lane.b32.xlu0 %v1411, 112
        %v1504 = vpop.permute.xlu0 %1503
        %1505 = vrot.lane.b32.xlu0 %v1412, 112
        %v1506 = vpop.permute.xlu0 %1505
        %1507 = vrot.lane.b32.xlu0 %v1413, 112
        %v1508 = vpop.permute.xlu0 %1507
        %1509 = vrot.lane.b32.xlu0 %v1414, 112
        %v1510 = vpop.permute.xlu0 %1509
        %v1543 = vadd.f32 %v1351, %v1448
        %v1544 = vadd.f32 %v1352, %v1450
        %v1545 = vadd.f32 %v1353, %v1452
        %v1546 = vadd.f32 %v1354, %v1454
        %v1547 = vadd.f32 %v1355, %v1456
        %v1548 = vadd.f32 %v1356, %v1458
        %v1549 = vadd.f32 %v1357, %v1460
        %v1550 = vadd.f32 %v1358, %v1462
        %v1551 = vadd.f32 %v1359, %v1464
        %v1552 = vadd.f32 %v1360, %v1466
        %v1553 = vadd.f32 %v1361, %v1468
        %v1554 = vadd.f32 %v1362, %v1470
        %v1555 = vadd.f32 %v1363, %v1472
        %v1556 = vadd.f32 %v1364, %v1474
        %v1557 = vadd.f32 %v1365, %v1476
        %v1558 = vadd.f32 %v1366, %v1478
        %v1559 = vadd.f32 %v1367, %v1480
        %v1560 = vadd.f32 %v1368, %v1482
        %v1561 = vadd.f32 %v1369, %v1484
        %v1562 = vadd.f32 %v1370, %v1486
        %v1563 = vadd.f32 %v1371, %v1488
        %v1564 = vadd.f32 %v1372, %v1490
        %v1565 = vadd.f32 %v1373, %v1492
        %v1566 = vadd.f32 %v1374, %v1494
        %v1567 = vadd.f32 %v1375, %v1496
        %v1568 = vadd.f32 %v1376, %v1498
        %v1569 = vadd.f32 %v1377, %v1500
        %v1570 = vadd.f32 %v1378, %v1502
        %v1571 = vadd.f32 %v1379, %v1504
        %v1572 = vadd.f32 %v1380, %v1506
        %v1573 = vadd.f32 %v1381, %v1508
        %v1574 = vadd.f32 %v1382, %v1510
        %v1575 = vld [vmem:[%s1126] sm:$0xff]
        %v1576 = vld [vmem:[%s1126 + $0x8] sm:$0xff]
        %v1577 = vld [vmem:[%s1126 + $0x18] sm:$0xff]
        %v1578 = vld [vmem:[%s1126 + $0x20] sm:$0xff]
        %v1579 = vld [vmem:[%s1126 + $0x30] sm:$0xff]
        %v1580 = vld [vmem:[%s1126 + $0x38] sm:$0xff]
        %v1581 = vld [vmem:[%s1126 + $0x48] sm:$0xff]
        %v1582 = vld [vmem:[%s1126 + $0x50] sm:$0xff]
        %v1583 = vld [vmem:[%s1126 + $0x60] sm:$0xff]
        %v1584 = vld [vmem:[%s1126 + $0x68] sm:$0xff]
        %v1585 = vld [vmem:[%s1126 + $0x78] sm:$0xff]
        %v1586 = vld [vmem:[%s1126 + $0x80] sm:$0xff]
        %v1587 = vld [vmem:[%s1126 + $0x90] sm:$0xff]
        %v1588 = vld [vmem:[%s1126 + $0x98] sm:$0xff]
        %v1589 = vld [vmem:[%s1126 + $0xa8] sm:$0xff]
        %v1590 = vld [vmem:[%s1126 + $0xb0] sm:$0xff]
        %v1591 = vld [vmem:[%s1126 + $0xc0] sm:$0xff]
        %v1592 = vld [vmem:[%s1126 + $0xc8] sm:$0xff]
        %v1593 = vld [vmem:[%s1126 + $0xd8] sm:$0xff]
        %v1594 = vld [vmem:[%s1126 + $0xe0] sm:$0xff]
        %v1595 = vld [vmem:[%s1126 + $0xf0] sm:$0xff]
        %v1596 = vld [vmem:[%s1126 + $0xf8] sm:$0xff]
        %v1597 = vld [vmem:[%s1126 + $0x108] sm:$0xff]
        %v1598 = vld [vmem:[%s1126 + $0x110] sm:$0xff]
        %v1599 = vld [vmem:[%s1126 + $0x120] sm:$0xff]
        %v1600 = vld [vmem:[%s1126 + $0x128] sm:$0xff]
        %v1601 = vld [vmem:[%s1126 + $0x138] sm:$0xff]
        %v1602 = vld [vmem:[%s1126 + $0x140] sm:$0xff]
        %v1603 = vld [vmem:[%s1126 + $0x150] sm:$0xff]
        %v1604 = vld [vmem:[%s1126 + $0x158] sm:$0xff]
        %v1605 = vld [vmem:[%s1126 + $0x168] sm:$0xff]
        %v1606 = vld [vmem:[%s1126 + $0x170] sm:$0xff]
        %1639 = vrot.lane.b32.xlu0 %v1575, 104
        %v1640 = vpop.permute.xlu0 %1639
        %1641 = vrot.lane.b32.xlu0 %v1576, 104
        %v1642 = vpop.permute.xlu0 %1641
        %1643 = vrot.lane.b32.xlu0 %v1577, 104
        %v1644 = vpop.permute.xlu0 %1643
        %1645 = vrot.lane.b32.xlu0 %v1578, 104
        %v1646 = vpop.permute.xlu0 %1645
        %1647 = vrot.lane.b32.xlu0 %v1579, 104
        %v1648 = vpop.permute.xlu0 %1647
        %1649 = vrot.lane.b32.xlu0 %v1580, 104
        %v1650 = vpop.permute.xlu0 %1649
        %1651 = vrot.lane.b32.xlu0 %v1581, 104
        %v1652 = vpop.permute.xlu0 %1651
        %1653 = vrot.lane.b32.xlu0 %v1582, 104
        %v1654 = vpop.permute.xlu0 %1653
        %1655 = vrot.lane.b32.xlu0 %v1583, 104
        %v1656 = vpop.permute.xlu0 %1655
        %1657 = vrot.lane.b32.xlu0 %v1584, 104
        %v1658 = vpop.permute.xlu0 %1657
        %1659 = vrot.lane.b32.xlu0 %v1585, 104
        %v1660 = vpop.permute.xlu0 %1659
        %1661 = vrot.lane.b32.xlu0 %v1586, 104
        %v1662 = vpop.permute.xlu0 %1661
        %1663 = vrot.lane.b32.xlu0 %v1587, 104
        %v1664 = vpop.permute.xlu0 %1663
        %1665 = vrot.lane.b32.xlu0 %v1588, 104
        %v1666 = vpop.permute.xlu0 %1665
        %1667 = vrot.lane.b32.xlu0 %v1589, 104
        %v1668 = vpop.permute.xlu0 %1667
        %1669 = vrot.lane.b32.xlu0 %v1590, 104
        %v1670 = vpop.permute.xlu0 %1669
        %1671 = vrot.lane.b32.xlu0 %v1591, 104
        %v1672 = vpop.permute.xlu0 %1671
        %1673 = vrot.lane.b32.xlu0 %v1592, 104
        %v1674 = vpop.permute.xlu0 %1673
        %1675 = vrot.lane.b32.xlu0 %v1593, 104
        %v1676 = vpop.permute.xlu0 %1675
        %1677 = vrot.lane.b32.xlu0 %v1594, 104
        %v1678 = vpop.permute.xlu0 %1677
        %1679 = vrot.lane.b32.xlu0 %v1595, 104
        %v1680 = vpop.permute.xlu0 %1679
        %1681 = vrot.lane.b32.xlu0 %v1596, 104
        %v1682 = vpop.permute.xlu0 %1681
        %1683 = vrot.lane.b32.xlu0 %v1597, 104
        %v1684 = vpop.permute.xlu0 %1683
        %1685 = vrot.lane.b32.xlu0 %v1598, 104
        %v1686 = vpop.permute.xlu0 %1685
        %1687 = vrot.lane.b32.xlu0 %v1599, 104
        %v1688 = vpop.permute.xlu0 %1687
        %1689 = vrot.lane.b32.xlu0 %v1600, 104
        %v1690 = vpop.permute.xlu0 %1689
        %1691 = vrot.lane.b32.xlu0 %v1601, 104
        %v1692 = vpop.permute.xlu0 %1691
        %1693 = vrot.lane.b32.xlu0 %v1602, 104
        %v1694 = vpop.permute.xlu0 %1693
        %1695 = vrot.lane.b32.xlu0 %v1603, 104
        %v1696 = vpop.permute.xlu0 %1695
        %1697 = vrot.lane.b32.xlu0 %v1604, 104
        %v1698 = vpop.permute.xlu0 %1697
        %1699 = vrot.lane.b32.xlu0 %v1605, 104
        %v1700 = vpop.permute.xlu0 %1699
        %1701 = vrot.lane.b32.xlu0 %v1606, 104
        %v1702 = vpop.permute.xlu0 %1701
        %v1735 = vadd.f32 %v1543, %v1640
        %v1736 = vadd.f32 %v1544, %v1642
        %v1737 = vadd.f32 %v1545, %v1644
        %v1738 = vadd.f32 %v1546, %v1646
        %v1739 = vadd.f32 %v1547, %v1648
        %v1740 = vadd.f32 %v1548, %v1650
        %v1741 = vadd.f32 %v1549, %v1652
        %v1742 = vadd.f32 %v1550, %v1654
        %v1743 = vadd.f32 %v1551, %v1656
        %v1744 = vadd.f32 %v1552, %v1658
        %v1745 = vadd.f32 %v1553, %v1660
        %v1746 = vadd.f32 %v1554, %v1662
        %v1747 = vadd.f32 %v1555, %v1664
        %v1748 = vadd.f32 %v1556, %v1666
        %v1749 = vadd.f32 %v1557, %v1668
        %v1750 = vadd.f32 %v1558, %v1670
        %v1751 = vadd.f32 %v1559, %v1672
        %v1752 = vadd.f32 %v1560, %v1674
        %v1753 = vadd.f32 %v1561, %v1676
        %v1754 = vadd.f32 %v1562, %v1678
        %v1755 = vadd.f32 %v1563, %v1680
        %v1756 = vadd.f32 %v1564, %v1682
        %v1757 = vadd.f32 %v1565, %v1684
        %v1758 = vadd.f32 %v1566, %v1686
        %v1759 = vadd.f32 %v1567, %v1688
        %v1760 = vadd.f32 %v1568, %v1690
        %v1761 = vadd.f32 %v1569, %v1692
        %v1762 = vadd.f32 %v1570, %v1694
        %v1763 = vadd.f32 %v1571, %v1696
        %v1764 = vadd.f32 %v1572, %v1698
        %v1765 = vadd.f32 %v1573, %v1700
        %v1766 = vadd.f32 %v1574, %v1702
        %v1767 = vld [vmem:[%s1126 + $0x1] sm:$0xff]
        %v1768 = vld [vmem:[%s1126 + $0x9] sm:$0xff]
        %v1769 = vld [vmem:[%s1126 + $0x19] sm:$0xff]
        %v1770 = vld [vmem:[%s1126 + $0x21] sm:$0xff]
        %v1771 = vld [vmem:[%s1126 + $0x31] sm:$0xff]
        %v1772 = vld [vmem:[%s1126 + $0x39] sm:$0xff]
        %v1773 = vld [vmem:[%s1126 + $0x49] sm:$0xff]
        %v1774 = vld [vmem:[%s1126 + $0x51] sm:$0xff]
        %v1775 = vld [vmem:[%s1126 + $0x61] sm:$0xff]
        %v1776 = vld [vmem:[%s1126 + $0x69] sm:$0xff]
        %v1777 = vld [vmem:[%s1126 + $0x79] sm:$0xff]
        %v1778 = vld [vmem:[%s1126 + $0x81] sm:$0xff]
        %v1779 = vld [vmem:[%s1126 + $0x91] sm:$0xff]
        %v1780 = vld [vmem:[%s1126 + $0x99] sm:$0xff]
        %v1781 = vld [vmem:[%s1126 + $0xa9] sm:$0xff]
        %v1782 = vld [vmem:[%s1126 + $0xb1] sm:$0xff]
        %v1783 = vld [vmem:[%s1126 + $0xc1] sm:$0xff]
        %v1784 = vld [vmem:[%s1126 + $0xc9] sm:$0xff]
        %v1785 = vld [vmem:[%s1126 + $0xd9] sm:$0xff]
        %v1786 = vld [vmem:[%s1126 + $0xe1] sm:$0xff]
        %v1787 = vld [vmem:[%s1126 + $0xf1] sm:$0xff]
        %v1788 = vld [vmem:[%s1126 + $0xf9] sm:$0xff]
        %v1789 = vld [vmem:[%s1126 + $0x109] sm:$0xff]
        %v1790 = vld [vmem:[%s1126 + $0x111] sm:$0xff]
        %v1791 = vld [vmem:[%s1126 + $0x121] sm:$0xff]
        %v1792 = vld [vmem:[%s1126 + $0x129] sm:$0xff]
        %v1793 = vld [vmem:[%s1126 + $0x139] sm:$0xff]
        %v1794 = vld [vmem:[%s1126 + $0x141] sm:$0xff]
        %v1795 = vld [vmem:[%s1126 + $0x151] sm:$0xff]
        %v1796 = vld [vmem:[%s1126 + $0x159] sm:$0xff]
        %v1797 = vld [vmem:[%s1126 + $0x169] sm:$0xff]
        %v1798 = vld [vmem:[%s1126 + $0x171] sm:$0xff]
        %1831 = vrot.lane.b32.xlu0 %v1767, 96
        %v1832 = vpop.permute.xlu0 %1831
        %1833 = vrot.lane.b32.xlu0 %v1768, 96
        %v1834 = vpop.permute.xlu0 %1833
        %1835 = vrot.lane.b32.xlu0 %v1769, 96
        %v1836 = vpop.permute.xlu0 %1835
        %1837 = vrot.lane.b32.xlu0 %v1770, 96
        %v1838 = vpop.permute.xlu0 %1837
        %1839 = vrot.lane.b32.xlu0 %v1771, 96
        %v1840 = vpop.permute.xlu0 %1839
        %1841 = vrot.lane.b32.xlu0 %v1772, 96
        %v1842 = vpop.permute.xlu0 %1841
        %1843 = vrot.lane.b32.xlu0 %v1773, 96
        %v1844 = vpop.permute.xlu0 %1843
        %1845 = vrot.lane.b32.xlu0 %v1774, 96
        %v1846 = vpop.permute.xlu0 %1845
        %1847 = vrot.lane.b32.xlu0 %v1775, 96
        %v1848 = vpop.permute.xlu0 %1847
        %1849 = vrot.lane.b32.xlu0 %v1776, 96
        %v1850 = vpop.permute.xlu0 %1849
        %1851 = vrot.lane.b32.xlu0 %v1777, 96
        %v1852 = vpop.permute.xlu0 %1851
        %1853 = vrot.lane.b32.xlu0 %v1778, 96
        %v1854 = vpop.permute.xlu0 %1853
        %1855 = vrot.lane.b32.xlu0 %v1779, 96
        %v1856 = vpop.permute.xlu0 %1855
        %1857 = vrot.lane.b32.xlu0 %v1780, 96
        %v1858 = vpop.permute.xlu0 %1857
        %1859 = vrot.lane.b32.xlu0 %v1781, 96
        %v1860 = vpop.permute.xlu0 %1859
        %1861 = vrot.lane.b32.xlu0 %v1782, 96
        %v1862 = vpop.permute.xlu0 %1861
        %1863 = vrot.lane.b32.xlu0 %v1783, 96
        %v1864 = vpop.permute.xlu0 %1863
        %1865 = vrot.lane.b32.xlu0 %v1784, 96
        %v1866 = vpop.permute.xlu0 %1865
        %1867 = vrot.lane.b32.xlu0 %v1785, 96
        %v1868 = vpop.permute.xlu0 %1867
        %1869 = vrot.lane.b32.xlu0 %v1786, 96
        %v1870 = vpop.permute.xlu0 %1869
        %1871 = vrot.lane.b32.xlu0 %v1787, 96
        %v1872 = vpop.permute.xlu0 %1871
        %1873 = vrot.lane.b32.xlu0 %v1788, 96
        %v1874 = vpop.permute.xlu0 %1873
        %1875 = vrot.lane.b32.xlu0 %v1789, 96
        %v1876 = vpop.permute.xlu0 %1875
        %1877 = vrot.lane.b32.xlu0 %v1790, 96
        %v1878 = vpop.permute.xlu0 %1877
        %1879 = vrot.lane.b32.xlu0 %v1791, 96
        %v1880 = vpop.permute.xlu0 %1879
        %1881 = vrot.lane.b32.xlu0 %v1792, 96
        %v1882 = vpop.permute.xlu0 %1881
        %1883 = vrot.lane.b32.xlu0 %v1793, 96
        %v1884 = vpop.permute.xlu0 %1883
        %1885 = vrot.lane.b32.xlu0 %v1794, 96
        %v1886 = vpop.permute.xlu0 %1885
        %1887 = vrot.lane.b32.xlu0 %v1795, 96
        %v1888 = vpop.permute.xlu0 %1887
        %1889 = vrot.lane.b32.xlu0 %v1796, 96
        %v1890 = vpop.permute.xlu0 %1889
        %1891 = vrot.lane.b32.xlu0 %v1797, 96
        %v1892 = vpop.permute.xlu0 %1891
        %1893 = vrot.lane.b32.xlu0 %v1798, 96
        %v1894 = vpop.permute.xlu0 %1893
        %v1927 = vadd.f32 %v1735, %v1832
        %v1928 = vadd.f32 %v1736, %v1834
        %v1929 = vadd.f32 %v1737, %v1836
        %v1930 = vadd.f32 %v1738, %v1838
        %v1931 = vadd.f32 %v1739, %v1840
        %v1932 = vadd.f32 %v1740, %v1842
        %v1933 = vadd.f32 %v1741, %v1844
        %v1934 = vadd.f32 %v1742, %v1846
        %v1935 = vadd.f32 %v1743, %v1848
        %v1936 = vadd.f32 %v1744, %v1850
        %v1937 = vadd.f32 %v1745, %v1852
        %v1938 = vadd.f32 %v1746, %v1854
        %v1939 = vadd.f32 %v1747, %v1856
        %v1940 = vadd.f32 %v1748, %v1858
        %v1941 = vadd.f32 %v1749, %v1860
        %v1942 = vadd.f32 %v1750, %v1862
        %v1943 = vadd.f32 %v1751, %v1864
        %v1944 = vadd.f32 %v1752, %v1866
        %v1945 = vadd.f32 %v1753, %v1868
        %v1946 = vadd.f32 %v1754, %v1870
        %v1947 = vadd.f32 %v1755, %v1872
        %v1948 = vadd.f32 %v1756, %v1874
        %v1949 = vadd.f32 %v1757, %v1876
        %v1950 = vadd.f32 %v1758, %v1878
        %v1951 = vadd.f32 %v1759, %v1880
        %v1952 = vadd.f32 %v1760, %v1882
        %v1953 = vadd.f32 %v1761, %v1884
        %v1954 = vadd.f32 %v1762, %v1886
        %v1955 = vadd.f32 %v1763, %v1888
        %v1956 = vadd.f32 %v1764, %v1890
        %v1957 = vadd.f32 %v1765, %v1892
        %v1958 = vadd.f32 %v1766, %v1894
        %v1959 = vld [vmem:[%s1126 + $0x2] sm:$0xff]
        %v1960 = vld [vmem:[%s1126 + $0xa] sm:$0xff]
        %v1961 = vld [vmem:[%s1126 + $0x1a] sm:$0xff]
        %v1962 = vld [vmem:[%s1126 + $0x22] sm:$0xff]
        %v1963 = vld [vmem:[%s1126 + $0x32] sm:$0xff]
        %v1964 = vld [vmem:[%s1126 + $0x3a] sm:$0xff]
        %v1965 = vld [vmem:[%s1126 + $0x4a] sm:$0xff]
        %v1966 = vld [vmem:[%s1126 + $0x52] sm:$0xff]
        %v1967 = vld [vmem:[%s1126 + $0x62] sm:$0xff]
        %v1968 = vld [vmem:[%s1126 + $0x6a] sm:$0xff]
        %v1969 = vld [vmem:[%s1126 + $0x7a] sm:$0xff]
        %v1970 = vld [vmem:[%s1126 + $0x82] sm:$0xff]
        %v1971 = vld [vmem:[%s1126 + $0x92] sm:$0xff]
        %v1972 = vld [vmem:[%s1126 + $0x9a] sm:$0xff]
        %v1973 = vld [vmem:[%s1126 + $0xaa] sm:$0xff]
        %v1974 = vld [vmem:[%s1126 + $0xb2] sm:$0xff]
        %v1975 = vld [vmem:[%s1126 + $0xc2] sm:$0xff]
        %v1976 = vld [vmem:[%s1126 + $0xca] sm:$0xff]
        %v1977 = vld [vmem:[%s1126 + $0xda] sm:$0xff]
        %v1978 = vld [vmem:[%s1126 + $0xe2] sm:$0xff]
        %v1979 = vld [vmem:[%s1126 + $0xf2] sm:$0xff]
        %v1980 = vld [vmem:[%s1126 + $0xfa] sm:$0xff]
        %v1981 = vld [vmem:[%s1126 + $0x10a] sm:$0xff]
        %v1982 = vld [vmem:[%s1126 + $0x112] sm:$0xff]
        %v1983 = vld [vmem:[%s1126 + $0x122] sm:$0xff]
        %v1984 = vld [vmem:[%s1126 + $0x12a] sm:$0xff]
        %v1985 = vld [vmem:[%s1126 + $0x13a] sm:$0xff]
        %v1986 = vld [vmem:[%s1126 + $0x142] sm:$0xff]
        %v1987 = vld [vmem:[%s1126 + $0x152] sm:$0xff]
        %v1988 = vld [vmem:[%s1126 + $0x15a] sm:$0xff]
        %v1989 = vld [vmem:[%s1126 + $0x16a] sm:$0xff]
        %v1990 = vld [vmem:[%s1126 + $0x172] sm:$0xff]
        %2023 = vrot.lane.b32.xlu0 %v1959, 88
        %v2024 = vpop.permute.xlu0 %2023
        %2025 = vrot.lane.b32.xlu0 %v1960, 88
        %v2026 = vpop.permute.xlu0 %2025
        %2027 = vrot.lane.b32.xlu0 %v1961, 88
        %v2028 = vpop.permute.xlu0 %2027
        %2029 = vrot.lane.b32.xlu0 %v1962, 88
        %v2030 = vpop.permute.xlu0 %2029
        %2031 = vrot.lane.b32.xlu0 %v1963, 88
        %v2032 = vpop.permute.xlu0 %2031
        %2033 = vrot.lane.b32.xlu0 %v1964, 88
        %v2034 = vpop.permute.xlu0 %2033
        %2035 = vrot.lane.b32.xlu0 %v1965, 88
        %v2036 = vpop.permute.xlu0 %2035
        %2037 = vrot.lane.b32.xlu0 %v1966, 88
        %v2038 = vpop.permute.xlu0 %2037
        %2039 = vrot.lane.b32.xlu0 %v1967, 88
        %v2040 = vpop.permute.xlu0 %2039
        %2041 = vrot.lane.b32.xlu0 %v1968, 88
        %v2042 = vpop.permute.xlu0 %2041
        %2043 = vrot.lane.b32.xlu0 %v1969, 88
        %v2044 = vpop.permute.xlu0 %2043
        %2045 = vrot.lane.b32.xlu0 %v1970, 88
        %v2046 = vpop.permute.xlu0 %2045
        %2047 = vrot.lane.b32.xlu0 %v1971, 88
        %v2048 = vpop.permute.xlu0 %2047
        %2049 = vrot.lane.b32.xlu0 %v1972, 88
        %v2050 = vpop.permute.xlu0 %2049
        %2051 = vrot.lane.b32.xlu0 %v1973, 88
        %v2052 = vpop.permute.xlu0 %2051
        %2053 = vrot.lane.b32.xlu0 %v1974, 88
        %v2054 = vpop.permute.xlu0 %2053
        %2055 = vrot.lane.b32.xlu0 %v1975, 88
        %v2056 = vpop.permute.xlu0 %2055
        %2057 = vrot.lane.b32.xlu0 %v1976, 88
        %v2058 = vpop.permute.xlu0 %2057
        %2059 = vrot.lane.b32.xlu0 %v1977, 88
        %v2060 = vpop.permute.xlu0 %2059
        %2061 = vrot.lane.b32.xlu0 %v1978, 88
        %v2062 = vpop.permute.xlu0 %2061
        %2063 = vrot.lane.b32.xlu0 %v1979, 88
        %v2064 = vpop.permute.xlu0 %2063
        %2065 = vrot.lane.b32.xlu0 %v1980, 88
        %v2066 = vpop.permute.xlu0 %2065
        %2067 = vrot.lane.b32.xlu0 %v1981, 88
        %v2068 = vpop.permute.xlu0 %2067
        %2069 = vrot.lane.b32.xlu0 %v1982, 88
        %v2070 = vpop.permute.xlu0 %2069
        %2071 = vrot.lane.b32.xlu0 %v1983, 88
        %v2072 = vpop.permute.xlu0 %2071
        %2073 = vrot.lane.b32.xlu0 %v1984, 88
        %v2074 = vpop.permute.xlu0 %2073
        %2075 = vrot.lane.b32.xlu0 %v1985, 88
        %v2076 = vpop.permute.xlu0 %2075
        %2077 = vrot.lane.b32.xlu0 %v1986, 88
        %v2078 = vpop.permute.xlu0 %2077
        %2079 = vrot.lane.b32.xlu0 %v1987, 88
        %v2080 = vpop.permute.xlu0 %2079
        %2081 = vrot.lane.b32.xlu0 %v1988, 88
        %v2082 = vpop.permute.xlu0 %2081
        %2083 = vrot.lane.b32.xlu0 %v1989, 88
        %v2084 = vpop.permute.xlu0 %2083
        %2085 = vrot.lane.b32.xlu0 %v1990, 88
        %v2086 = vpop.permute.xlu0 %2085
        %v2119 = vadd.f32 %v1927, %v2024
        %v2120 = vadd.f32 %v1928, %v2026
        %v2121 = vadd.f32 %v1929, %v2028
        %v2122 = vadd.f32 %v1930, %v2030
        %v2123 = vadd.f32 %v1931, %v2032
        %v2124 = vadd.f32 %v1932, %v2034
        %v2125 = vadd.f32 %v1933, %v2036
        %v2126 = vadd.f32 %v1934, %v2038
        %v2127 = vadd.f32 %v1935, %v2040
        %v2128 = vadd.f32 %v1936, %v2042
        %v2129 = vadd.f32 %v1937, %v2044
        %v2130 = vadd.f32 %v1938, %v2046
        %v2131 = vadd.f32 %v1939, %v2048
        %v2132 = vadd.f32 %v1940, %v2050
        %v2133 = vadd.f32 %v1941, %v2052
        %v2134 = vadd.f32 %v1942, %v2054
        %v2135 = vadd.f32 %v1943, %v2056
        %v2136 = vadd.f32 %v1944, %v2058
        %v2137 = vadd.f32 %v1945, %v2060
        %v2138 = vadd.f32 %v1946, %v2062
        %v2139 = vadd.f32 %v1947, %v2064
        %v2140 = vadd.f32 %v1948, %v2066
        %v2141 = vadd.f32 %v1949, %v2068
        %v2142 = vadd.f32 %v1950, %v2070
        %v2143 = vadd.f32 %v1951, %v2072
        %v2144 = vadd.f32 %v1952, %v2074
        %v2145 = vadd.f32 %v1953, %v2076
        %v2146 = vadd.f32 %v1954, %v2078
        %v2147 = vadd.f32 %v1955, %v2080
        %v2148 = vadd.f32 %v1956, %v2082
        %v2149 = vadd.f32 %v1957, %v2084
        %v2150 = vadd.f32 %v1958, %v2086
        %s2151 = scalar_lea.vmem [#allocation2], 48
        %v2152 = vld [vmem:[%s2151] sm:$0xff]
        %v2153 = vld [vmem:[%s2151 + $0x8] sm:$0xff]
        %v2154 = vld [vmem:[%s2151 + $0x18] sm:$0xff]
        %v2155 = vld [vmem:[%s2151 + $0x20] sm:$0xff]
        %v2156 = vld [vmem:[%s2151 + $0x30] sm:$0xff]
        %v2157 = vld [vmem:[%s2151 + $0x38] sm:$0xff]
        %v2158 = vld [vmem:[%s2151 + $0x48] sm:$0xff]
        %v2159 = vld [vmem:[%s2151 + $0x50] sm:$0xff]
        %v2160 = vld [vmem:[%s2151 + $0x60] sm:$0xff]
        %v2161 = vld [vmem:[%s2151 + $0x68] sm:$0xff]
        %v2162 = vld [vmem:[%s2151 + $0x78] sm:$0xff]
        %v2163 = vld [vmem:[%s2151 + $0x80] sm:$0xff]
        %v2164 = vld [vmem:[%s2151 + $0x90] sm:$0xff]
        %v2165 = vld [vmem:[%s2151 + $0x98] sm:$0xff]
        %v2166 = vld [vmem:[%s2151 + $0xa8] sm:$0xff]
        %v2167 = vld [vmem:[%s2151 + $0xb0] sm:$0xff]
        %v2168 = vld [vmem:[%s2151 + $0xc0] sm:$0xff]
        %v2169 = vld [vmem:[%s2151 + $0xc8] sm:$0xff]
        %v2170 = vld [vmem:[%s2151 + $0xd8] sm:$0xff]
        %v2171 = vld [vmem:[%s2151 + $0xe0] sm:$0xff]
        %v2172 = vld [vmem:[%s2151 + $0xf0] sm:$0xff]
        %v2173 = vld [vmem:[%s2151 + $0xf8] sm:$0xff]
        %v2174 = vld [vmem:[%s2151 + $0x108] sm:$0xff]
        %v2175 = vld [vmem:[%s2151 + $0x110] sm:$0xff]
        %v2176 = vld [vmem:[%s2151 + $0x120] sm:$0xff]
        %v2177 = vld [vmem:[%s2151 + $0x128] sm:$0xff]
        %v2178 = vld [vmem:[%s2151 + $0x138] sm:$0xff]
        %v2179 = vld [vmem:[%s2151 + $0x140] sm:$0xff]
        %v2180 = vld [vmem:[%s2151 + $0x150] sm:$0xff]
        %v2181 = vld [vmem:[%s2151 + $0x158] sm:$0xff]
        %v2182 = vld [vmem:[%s2151 + $0x168] sm:$0xff]
        %v2183 = vld [vmem:[%s2151 + $0x170] sm:$0xff]
        %2216 = vrot.lane.b32.xlu0 %v2152, 80
        %v2217 = vpop.permute.xlu0 %2216
        %2218 = vrot.lane.b32.xlu0 %v2153, 80
        %v2219 = vpop.permute.xlu0 %2218
        %2220 = vrot.lane.b32.xlu0 %v2154, 80
        %v2221 = vpop.permute.xlu0 %2220
        %2222 = vrot.lane.b32.xlu0 %v2155, 80
        %v2223 = vpop.permute.xlu0 %2222
        %2224 = vrot.lane.b32.xlu0 %v2156, 80
        %v2225 = vpop.permute.xlu0 %2224
        %2226 = vrot.lane.b32.xlu0 %v2157, 80
        %v2227 = vpop.permute.xlu0 %2226
        %2228 = vrot.lane.b32.xlu0 %v2158, 80
        %v2229 = vpop.permute.xlu0 %2228
        %2230 = vrot.lane.b32.xlu0 %v2159, 80
        %v2231 = vpop.permute.xlu0 %2230
        %2232 = vrot.lane.b32.xlu0 %v2160, 80
        %v2233 = vpop.permute.xlu0 %2232
        %2234 = vrot.lane.b32.xlu0 %v2161, 80
        %v2235 = vpop.permute.xlu0 %2234
        %2236 = vrot.lane.b32.xlu0 %v2162, 80
        %v2237 = vpop.permute.xlu0 %2236
        %2238 = vrot.lane.b32.xlu0 %v2163, 80
        %v2239 = vpop.permute.xlu0 %2238
        %2240 = vrot.lane.b32.xlu0 %v2164, 80
        %v2241 = vpop.permute.xlu0 %2240
        %2242 = vrot.lane.b32.xlu0 %v2165, 80
        %v2243 = vpop.permute.xlu0 %2242
        %2244 = vrot.lane.b32.xlu0 %v2166, 80
        %v2245 = vpop.permute.xlu0 %2244
        %2246 = vrot.lane.b32.xlu0 %v2167, 80
        %v2247 = vpop.permute.xlu0 %2246
        %2248 = vrot.lane.b32.xlu0 %v2168, 80
        %v2249 = vpop.permute.xlu0 %2248
        %2250 = vrot.lane.b32.xlu0 %v2169, 80
        %v2251 = vpop.permute.xlu0 %2250
        %2252 = vrot.lane.b32.xlu0 %v2170, 80
        %v2253 = vpop.permute.xlu0 %2252
        %2254 = vrot.lane.b32.xlu0 %v2171, 80
        %v2255 = vpop.permute.xlu0 %2254
        %2256 = vrot.lane.b32.xlu0 %v2172, 80
        %v2257 = vpop.permute.xlu0 %2256
        %2258 = vrot.lane.b32.xlu0 %v2173, 80
        %v2259 = vpop.permute.xlu0 %2258
        %2260 = vrot.lane.b32.xlu0 %v2174, 80
        %v2261 = vpop.permute.xlu0 %2260
        %2262 = vrot.lane.b32.xlu0 %v2175, 80
        %v2263 = vpop.permute.xlu0 %2262
        %2264 = vrot.lane.b32.xlu0 %v2176, 80
        %v2265 = vpop.permute.xlu0 %2264
        %2266 = vrot.lane.b32.xlu0 %v2177, 80
        %v2267 = vpop.permute.xlu0 %2266
        %2268 = vrot.lane.b32.xlu0 %v2178, 80
        %v2269 = vpop.permute.xlu0 %2268
        %2270 = vrot.lane.b32.xlu0 %v2179, 80
        %v2271 = vpop.permute.xlu0 %2270
        %2272 = vrot.lane.b32.xlu0 %v2180, 80
        %v2273 = vpop.permute.xlu0 %2272
        %2274 = vrot.lane.b32.xlu0 %v2181, 80
        %v2275 = vpop.permute.xlu0 %2274
        %2276 = vrot.lane.b32.xlu0 %v2182, 80
        %v2277 = vpop.permute.xlu0 %2276
        %2278 = vrot.lane.b32.xlu0 %v2183, 80
        %v2279 = vpop.permute.xlu0 %2278
        %v2312 = vadd.f32 %v2119, %v2217
        %v2313 = vadd.f32 %v2120, %v2219
        %v2314 = vadd.f32 %v2121, %v2221
        %v2315 = vadd.f32 %v2122, %v2223
        %v2316 = vadd.f32 %v2123, %v2225
        %v2317 = vadd.f32 %v2124, %v2227
        %v2318 = vadd.f32 %v2125, %v2229
        %v2319 = vadd.f32 %v2126, %v2231
        %v2320 = vadd.f32 %v2127, %v2233
        %v2321 = vadd.f32 %v2128, %v2235
        %v2322 = vadd.f32 %v2129, %v2237
        %v2323 = vadd.f32 %v2130, %v2239
        %v2324 = vadd.f32 %v2131, %v2241
        %v2325 = vadd.f32 %v2132, %v2243
        %v2326 = vadd.f32 %v2133, %v2245
        %v2327 = vadd.f32 %v2134, %v2247
        %v2328 = vadd.f32 %v2135, %v2249
        %v2329 = vadd.f32 %v2136, %v2251
        %v2330 = vadd.f32 %v2137, %v2253
        %v2331 = vadd.f32 %v2138, %v2255
        %v2332 = vadd.f32 %v2139, %v2257
        %v2333 = vadd.f32 %v2140, %v2259
        %v2334 = vadd.f32 %v2141, %v2261
        %v2335 = vadd.f32 %v2142, %v2263
        %v2336 = vadd.f32 %v2143, %v2265
        %v2337 = vadd.f32 %v2144, %v2267
        %v2338 = vadd.f32 %v2145, %v2269
        %v2339 = vadd.f32 %v2146, %v2271
        %v2340 = vadd.f32 %v2147, %v2273
        %v2341 = vadd.f32 %v2148, %v2275
        %v2342 = vadd.f32 %v2149, %v2277
        %v2343 = vadd.f32 %v2150, %v2279
        %v2344 = vld [vmem:[%s2151 + $0x1] sm:$0xff]
        %v2345 = vld [vmem:[%s2151 + $0x9] sm:$0xff]
        %v2346 = vld [vmem:[%s2151 + $0x19] sm:$0xff]
        %v2347 = vld [vmem:[%s2151 + $0x21] sm:$0xff]
        %v2348 = vld [vmem:[%s2151 + $0x31] sm:$0xff]
        %v2349 = vld [vmem:[%s2151 + $0x39] sm:$0xff]
        %v2350 = vld [vmem:[%s2151 + $0x49] sm:$0xff]
        %v2351 = vld [vmem:[%s2151 + $0x51] sm:$0xff]
        %v2352 = vld [vmem:[%s2151 + $0x61] sm:$0xff]
        %v2353 = vld [vmem:[%s2151 + $0x69] sm:$0xff]
        %v2354 = vld [vmem:[%s2151 + $0x79] sm:$0xff]
        %v2355 = vld [vmem:[%s2151 + $0x81] sm:$0xff]
        %v2356 = vld [vmem:[%s2151 + $0x91] sm:$0xff]
        %v2357 = vld [vmem:[%s2151 + $0x99] sm:$0xff]
        %v2358 = vld [vmem:[%s2151 + $0xa9] sm:$0xff]
        %v2359 = vld [vmem:[%s2151 + $0xb1] sm:$0xff]
        %v2360 = vld [vmem:[%s2151 + $0xc1] sm:$0xff]
        %v2361 = vld [vmem:[%s2151 + $0xc9] sm:$0xff]
        %v2362 = vld [vmem:[%s2151 + $0xd9] sm:$0xff]
        %v2363 = vld [vmem:[%s2151 + $0xe1] sm:$0xff]
        %v2364 = vld [vmem:[%s2151 + $0xf1] sm:$0xff]
        %v2365 = vld [vmem:[%s2151 + $0xf9] sm:$0xff]
        %v2366 = vld [vmem:[%s2151 + $0x109] sm:$0xff]
        %v2367 = vld [vmem:[%s2151 + $0x111] sm:$0xff]
        %v2368 = vld [vmem:[%s2151 + $0x121] sm:$0xff]
        %v2369 = vld [vmem:[%s2151 + $0x129] sm:$0xff]
        %v2370 = vld [vmem:[%s2151 + $0x139] sm:$0xff]
        %v2371 = vld [vmem:[%s2151 + $0x141] sm:$0xff]
        %v2372 = vld [vmem:[%s2151 + $0x151] sm:$0xff]
        %v2373 = vld [vmem:[%s2151 + $0x159] sm:$0xff]
        %v2374 = vld [vmem:[%s2151 + $0x169] sm:$0xff]
        %v2375 = vld [vmem:[%s2151 + $0x171] sm:$0xff]
        %2408 = vrot.lane.b32.xlu0 %v2344, 72
        %v2409 = vpop.permute.xlu0 %2408
        %2410 = vrot.lane.b32.xlu0 %v2345, 72
        %v2411 = vpop.permute.xlu0 %2410
        %2412 = vrot.lane.b32.xlu0 %v2346, 72
        %v2413 = vpop.permute.xlu0 %2412
        %2414 = vrot.lane.b32.xlu0 %v2347, 72
        %v2415 = vpop.permute.xlu0 %2414
        %2416 = vrot.lane.b32.xlu0 %v2348, 72
        %v2417 = vpop.permute.xlu0 %2416
        %2418 = vrot.lane.b32.xlu0 %v2349, 72
        %v2419 = vpop.permute.xlu0 %2418
        %2420 = vrot.lane.b32.xlu0 %v2350, 72
        %v2421 = vpop.permute.xlu0 %2420
        %2422 = vrot.lane.b32.xlu0 %v2351, 72
        %v2423 = vpop.permute.xlu0 %2422
        %2424 = vrot.lane.b32.xlu0 %v2352, 72
        %v2425 = vpop.permute.xlu0 %2424
        %2426 = vrot.lane.b32.xlu0 %v2353, 72
        %v2427 = vpop.permute.xlu0 %2426
        %2428 = vrot.lane.b32.xlu0 %v2354, 72
        %v2429 = vpop.permute.xlu0 %2428
        %2430 = vrot.lane.b32.xlu0 %v2355, 72
        %v2431 = vpop.permute.xlu0 %2430
        %2432 = vrot.lane.b32.xlu0 %v2356, 72
        %v2433 = vpop.permute.xlu0 %2432
        %2434 = vrot.lane.b32.xlu0 %v2357, 72
        %v2435 = vpop.permute.xlu0 %2434
        %2436 = vrot.lane.b32.xlu0 %v2358, 72
        %v2437 = vpop.permute.xlu0 %2436
        %2438 = vrot.lane.b32.xlu0 %v2359, 72
        %v2439 = vpop.permute.xlu0 %2438
        %2440 = vrot.lane.b32.xlu0 %v2360, 72
        %v2441 = vpop.permute.xlu0 %2440
        %2442 = vrot.lane.b32.xlu0 %v2361, 72
        %v2443 = vpop.permute.xlu0 %2442
        %2444 = vrot.lane.b32.xlu0 %v2362, 72
        %v2445 = vpop.permute.xlu0 %2444
        %2446 = vrot.lane.b32.xlu0 %v2363, 72
        %v2447 = vpop.permute.xlu0 %2446
        %2448 = vrot.lane.b32.xlu0 %v2364, 72
        %v2449 = vpop.permute.xlu0 %2448
        %2450 = vrot.lane.b32.xlu0 %v2365, 72
        %v2451 = vpop.permute.xlu0 %2450
        %2452 = vrot.lane.b32.xlu0 %v2366, 72
        %v2453 = vpop.permute.xlu0 %2452
        %2454 = vrot.lane.b32.xlu0 %v2367, 72
        %v2455 = vpop.permute.xlu0 %2454
        %2456 = vrot.lane.b32.xlu0 %v2368, 72
        %v2457 = vpop.permute.xlu0 %2456
        %2458 = vrot.lane.b32.xlu0 %v2369, 72
        %v2459 = vpop.permute.xlu0 %2458
        %2460 = vrot.lane.b32.xlu0 %v2370, 72
        %v2461 = vpop.permute.xlu0 %2460
        %2462 = vrot.lane.b32.xlu0 %v2371, 72
        %v2463 = vpop.permute.xlu0 %2462
        %2464 = vrot.lane.b32.xlu0 %v2372, 72
        %v2465 = vpop.permute.xlu0 %2464
        %2466 = vrot.lane.b32.xlu0 %v2373, 72
        %v2467 = vpop.permute.xlu0 %2466
        %2468 = vrot.lane.b32.xlu0 %v2374, 72
        %v2469 = vpop.permute.xlu0 %2468
        %2470 = vrot.lane.b32.xlu0 %v2375, 72
        %v2471 = vpop.permute.xlu0 %2470
        %v2504 = vadd.f32 %v2312, %v2409
        %v2505 = vadd.f32 %v2313, %v2411
        %v2506 = vadd.f32 %v2314, %v2413
        %v2507 = vadd.f32 %v2315, %v2415
        %v2508 = vadd.f32 %v2316, %v2417
        %v2509 = vadd.f32 %v2317, %v2419
        %v2510 = vadd.f32 %v2318, %v2421
        %v2511 = vadd.f32 %v2319, %v2423
        %v2512 = vadd.f32 %v2320, %v2425
        %v2513 = vadd.f32 %v2321, %v2427
        %v2514 = vadd.f32 %v2322, %v2429
        %v2515 = vadd.f32 %v2323, %v2431
        %v2516 = vadd.f32 %v2324, %v2433
        %v2517 = vadd.f32 %v2325, %v2435
        %v2518 = vadd.f32 %v2326, %v2437
        %v2519 = vadd.f32 %v2327, %v2439
        %v2520 = vadd.f32 %v2328, %v2441
        %v2521 = vadd.f32 %v2329, %v2443
        %v2522 = vadd.f32 %v2330, %v2445
        %v2523 = vadd.f32 %v2331, %v2447
        %v2524 = vadd.f32 %v2332, %v2449
        %v2525 = vadd.f32 %v2333, %v2451
        %v2526 = vadd.f32 %v2334, %v2453
        %v2527 = vadd.f32 %v2335, %v2455
        %v2528 = vadd.f32 %v2336, %v2457
        %v2529 = vadd.f32 %v2337, %v2459
        %v2530 = vadd.f32 %v2338, %v2461
        %v2531 = vadd.f32 %v2339, %v2463
        %v2532 = vadd.f32 %v2340, %v2465
        %v2533 = vadd.f32 %v2341, %v2467
        %v2534 = vadd.f32 %v2342, %v2469
        %v2535 = vadd.f32 %v2343, %v2471
        %v2536 = vld [vmem:[%s2151 + $0x2] sm:$0xff]
        %v2537 = vld [vmem:[%s2151 + $0xa] sm:$0xff]
        %v2538 = vld [vmem:[%s2151 + $0x1a] sm:$0xff]
        %v2539 = vld [vmem:[%s2151 + $0x22] sm:$0xff]
        %v2540 = vld [vmem:[%s2151 + $0x32] sm:$0xff]
        %v2541 = vld [vmem:[%s2151 + $0x3a] sm:$0xff]
        %v2542 = vld [vmem:[%s2151 + $0x4a] sm:$0xff]
        %v2543 = vld [vmem:[%s2151 + $0x52] sm:$0xff]
        %v2544 = vld [vmem:[%s2151 + $0x62] sm:$0xff]
        %v2545 = vld [vmem:[%s2151 + $0x6a] sm:$0xff]
        %v2546 = vld [vmem:[%s2151 + $0x7a] sm:$0xff]
        %v2547 = vld [vmem:[%s2151 + $0x82] sm:$0xff]
        %v2548 = vld [vmem:[%s2151 + $0x92] sm:$0xff]
        %v2549 = vld [vmem:[%s2151 + $0x9a] sm:$0xff]
        %v2550 = vld [vmem:[%s2151 + $0xaa] sm:$0xff]
        %v2551 = vld [vmem:[%s2151 + $0xb2] sm:$0xff]
        %v2552 = vld [vmem:[%s2151 + $0xc2] sm:$0xff]
        %v2553 = vld [vmem:[%s2151 + $0xca] sm:$0xff]
        %v2554 = vld [vmem:[%s2151 + $0xda] sm:$0xff]
        %v2555 = vld [vmem:[%s2151 + $0xe2] sm:$0xff]
        %v2556 = vld [vmem:[%s2151 + $0xf2] sm:$0xff]
        %v2557 = vld [vmem:[%s2151 + $0xfa] sm:$0xff]
        %v2558 = vld [vmem:[%s2151 + $0x10a] sm:$0xff]
        %v2559 = vld [vmem:[%s2151 + $0x112] sm:$0xff]
        %v2560 = vld [vmem:[%s2151 + $0x122] sm:$0xff]
        %v2561 = vld [vmem:[%s2151 + $0x12a] sm:$0xff]
        %v2562 = vld [vmem:[%s2151 + $0x13a] sm:$0xff]
        %v2563 = vld [vmem:[%s2151 + $0x142] sm:$0xff]
        %v2564 = vld [vmem:[%s2151 + $0x152] sm:$0xff]
        %v2565 = vld [vmem:[%s2151 + $0x15a] sm:$0xff]
        %v2566 = vld [vmem:[%s2151 + $0x16a] sm:$0xff]
        %v2567 = vld [vmem:[%s2151 + $0x172] sm:$0xff]
        %2600 = vrot.lane.b32.xlu0 %v2536, 64
        %v2601 = vpop.permute.xlu0 %2600
        %2602 = vrot.lane.b32.xlu0 %v2537, 64
        %v2603 = vpop.permute.xlu0 %2602
        %2604 = vrot.lane.b32.xlu0 %v2538, 64
        %v2605 = vpop.permute.xlu0 %2604
        %2606 = vrot.lane.b32.xlu0 %v2539, 64
        %v2607 = vpop.permute.xlu0 %2606
        %2608 = vrot.lane.b32.xlu0 %v2540, 64
        %v2609 = vpop.permute.xlu0 %2608
        %2610 = vrot.lane.b32.xlu0 %v2541, 64
        %v2611 = vpop.permute.xlu0 %2610
        %2612 = vrot.lane.b32.xlu0 %v2542, 64
        %v2613 = vpop.permute.xlu0 %2612
        %2614 = vrot.lane.b32.xlu0 %v2543, 64
        %v2615 = vpop.permute.xlu0 %2614
        %2616 = vrot.lane.b32.xlu0 %v2544, 64
        %v2617 = vpop.permute.xlu0 %2616
        %2618 = vrot.lane.b32.xlu0 %v2545, 64
        %v2619 = vpop.permute.xlu0 %2618
        %2620 = vrot.lane.b32.xlu0 %v2546, 64
        %v2621 = vpop.permute.xlu0 %2620
        %2622 = vrot.lane.b32.xlu0 %v2547, 64
        %v2623 = vpop.permute.xlu0 %2622
        %2624 = vrot.lane.b32.xlu0 %v2548, 64
        %v2625 = vpop.permute.xlu0 %2624
        %2626 = vrot.lane.b32.xlu0 %v2549, 64
        %v2627 = vpop.permute.xlu0 %2626
        %2628 = vrot.lane.b32.xlu0 %v2550, 64
        %v2629 = vpop.permute.xlu0 %2628
        %2630 = vrot.lane.b32.xlu0 %v2551, 64
        %v2631 = vpop.permute.xlu0 %2630
        %2632 = vrot.lane.b32.xlu0 %v2552, 64
        %v2633 = vpop.permute.xlu0 %2632
        %2634 = vrot.lane.b32.xlu0 %v2553, 64
        %v2635 = vpop.permute.xlu0 %2634
        %2636 = vrot.lane.b32.xlu0 %v2554, 64
        %v2637 = vpop.permute.xlu0 %2636
        %2638 = vrot.lane.b32.xlu0 %v2555, 64
        %v2639 = vpop.permute.xlu0 %2638
        %2640 = vrot.lane.b32.xlu0 %v2556, 64
        %v2641 = vpop.permute.xlu0 %2640
        %2642 = vrot.lane.b32.xlu0 %v2557, 64
        %v2643 = vpop.permute.xlu0 %2642
        %2644 = vrot.lane.b32.xlu0 %v2558, 64
        %v2645 = vpop.permute.xlu0 %2644
        %2646 = vrot.lane.b32.xlu0 %v2559, 64
        %v2647 = vpop.permute.xlu0 %2646
        %2648 = vrot.lane.b32.xlu0 %v2560, 64
        %v2649 = vpop.permute.xlu0 %2648
        %2650 = vrot.lane.b32.xlu0 %v2561, 64
        %v2651 = vpop.permute.xlu0 %2650
        %2652 = vrot.lane.b32.xlu0 %v2562, 64
        %v2653 = vpop.permute.xlu0 %2652
        %2654 = vrot.lane.b32.xlu0 %v2563, 64
        %v2655 = vpop.permute.xlu0 %2654
        %2656 = vrot.lane.b32.xlu0 %v2564, 64
        %v2657 = vpop.permute.xlu0 %2656
        %2658 = vrot.lane.b32.xlu0 %v2565, 64
        %v2659 = vpop.permute.xlu0 %2658
        %2660 = vrot.lane.b32.xlu0 %v2566, 64
        %v2661 = vpop.permute.xlu0 %2660
        %2662 = vrot.lane.b32.xlu0 %v2567, 64
        %v2663 = vpop.permute.xlu0 %2662
        %v2696 = vadd.f32 %v2504, %v2601
        %v2697 = vadd.f32 %v2505, %v2603
        %v2698 = vadd.f32 %v2506, %v2605
        %v2699 = vadd.f32 %v2507, %v2607
        %v2700 = vadd.f32 %v2508, %v2609
        %v2701 = vadd.f32 %v2509, %v2611
        %v2702 = vadd.f32 %v2510, %v2613
        %v2703 = vadd.f32 %v2511, %v2615
        %v2704 = vadd.f32 %v2512, %v2617
        %v2705 = vadd.f32 %v2513, %v2619
        %v2706 = vadd.f32 %v2514, %v2621
        %v2707 = vadd.f32 %v2515, %v2623
        %v2708 = vadd.f32 %v2516, %v2625
        %v2709 = vadd.f32 %v2517, %v2627
        %v2710 = vadd.f32 %v2518, %v2629
        %v2711 = vadd.f32 %v2519, %v2631
        %v2712 = vadd.f32 %v2520, %v2633
        %v2713 = vadd.f32 %v2521, %v2635
        %v2714 = vadd.f32 %v2522, %v2637
        %v2715 = vadd.f32 %v2523, %v2639
        %v2716 = vadd.f32 %v2524, %v2641
        %v2717 = vadd.f32 %v2525, %v2643
        %v2718 = vadd.f32 %v2526, %v2645
        %v2719 = vadd.f32 %v2527, %v2647
        %v2720 = vadd.f32 %v2528, %v2649
        %v2721 = vadd.f32 %v2529, %v2651
        %v2722 = vadd.f32 %v2530, %v2653
        %v2723 = vadd.f32 %v2531, %v2655
        %v2724 = vadd.f32 %v2532, %v2657
        %v2725 = vadd.f32 %v2533, %v2659
        %v2726 = vadd.f32 %v2534, %v2661
        %v2727 = vadd.f32 %v2535, %v2663
        %v2728 = vcombine.low %v2696, %v2700
        %v2729 = vcombine.high %v2696, %v2700
        %v2731 = vunpack.c.l.s4 1983009808
        %v2732 = vunpack.c.0.s8 %v2731
        %v2733 = vlaneseq
        %v2734 = vshrl.u32 %v2733, 7
        %v2735 = vsub.s32 %v2732, %v2734
        %v2736 = vrot.slane %v2728, %v2735
        %v2738 = vunpack.c.l.s4 1983009808
        %v2739 = vunpack.c.0.s8 %v2738
        %v2740 = vlaneseq
        %v2741 = vshrl.u32 %v2740, 7
        %v2742 = vsub.s32 %v2739, %v2741
        %v2743 = vrot.slane %v2729, %v2742
        %v2744 = vcombine.low %v2698, %v2702
        %v2745 = vcombine.high %v2698, %v2702
        %v2747 = vunpack.c.l.s4 1983009808
        %v2748 = vunpack.c.0.s8 %v2747
        %v2749 = vlaneseq
        %v2750 = vshrl.u32 %v2749, 7
        %v2751 = vsub.s32 %v2748, %v2750
        %v2752 = vrot.slane %v2744, %v2751
        %v2754 = vunpack.c.l.s4 1983009808
        %v2755 = vunpack.c.0.s8 %v2754
        %v2756 = vlaneseq
        %v2757 = vshrl.u32 %v2756, 7
        %v2758 = vsub.s32 %v2755, %v2757
        %v2759 = vrot.slane %v2745, %v2758
        %v2760 = vcombine.low %v2704, %v2708
        %v2761 = vcombine.high %v2704, %v2708
        %v2763 = vunpack.c.l.s4 1983009808
        %v2764 = vunpack.c.0.s8 %v2763
        %v2765 = vlaneseq
        %v2766 = vshrl.u32 %v2765, 7
        %v2767 = vsub.s32 %v2764, %v2766
        %v2768 = vrot.slane %v2760, %v2767
        %v2770 = vunpack.c.l.s4 1983009808
        %v2771 = vunpack.c.0.s8 %v2770
        %v2772 = vlaneseq
        %v2773 = vshrl.u32 %v2772, 7
        %v2774 = vsub.s32 %v2771, %v2773
        %v2775 = vrot.slane %v2761, %v2774
        %v2776 = vcombine.low %v2706, %v2710
        %v2777 = vcombine.high %v2706, %v2710
        %v2779 = vunpack.c.l.s4 1983009808
        %v2780 = vunpack.c.0.s8 %v2779
        %v2781 = vlaneseq
        %v2782 = vshrl.u32 %v2781, 7
        %v2783 = vsub.s32 %v2780, %v2782
        %v2784 = vrot.slane %v2776, %v2783
        %v2786 = vunpack.c.l.s4 1983009808
        %v2787 = vunpack.c.0.s8 %v2786
        %v2788 = vlaneseq
        %v2789 = vshrl.u32 %v2788, 7
        %v2790 = vsub.s32 %v2787, %v2789
        %v2791 = vrot.slane %v2777, %v2790
        %v2792 = vcombine.low %v2736, %v2752
        %v2793 = vcombine.high %v2736, %v2752
        %v2795 = vunpack.c.l.s4 1934713408
        %v2796 = vunpack.c.0.s8 %v2795
        %v2797 = vlaneseq
        %v2798 = vshrl.u32 %v2797, 7
        %v2799 = vsub.s32 %v2796, %v2798
        %v2800 = vrot.slane %v2792, %v2799
        %v2802 = vunpack.c.l.s4 1934713408
        %v2803 = vunpack.c.0.s8 %v2802
        %v2804 = vlaneseq
        %v2805 = vshrl.u32 %v2804, 7
        %v2806 = vsub.s32 %v2803, %v2805
        %v2807 = vrot.slane %v2793, %v2806
        %v2808 = vcombine.low %v2743, %v2759
        %v2809 = vcombine.high %v2743, %v2759
        %v2811 = vunpack.c.l.s4 1934713408
        %v2812 = vunpack.c.0.s8 %v2811
        %v2813 = vlaneseq
        %v2814 = vshrl.u32 %v2813, 7
        %v2815 = vsub.s32 %v2812, %v2814
        %v2816 = vrot.slane %v2808, %v2815
        %v2818 = vunpack.c.l.s4 1934713408
        %v2819 = vunpack.c.0.s8 %v2818
        %v2820 = vlaneseq
        %v2821 = vshrl.u32 %v2820, 7
        %v2822 = vsub.s32 %v2819, %v2821
        %v2823 = vrot.slane %v2809, %v2822
        %v2824 = vcombine.low %v2768, %v2784
        %v2825 = vcombine.high %v2768, %v2784
        %v2827 = vunpack.c.l.s4 1934713408
        %v2828 = vunpack.c.0.s8 %v2827
        %v2829 = vlaneseq
        %v2830 = vshrl.u32 %v2829, 7
        %v2831 = vsub.s32 %v2828, %v2830
        %v2832 = vrot.slane %v2824, %v2831
        %v2834 = vunpack.c.l.s4 1934713408
        %v2835 = vunpack.c.0.s8 %v2834
        %v2836 = vlaneseq
        %v2837 = vshrl.u32 %v2836, 7
        %v2838 = vsub.s32 %v2835, %v2837
        %v2839 = vrot.slane %v2825, %v2838
        %v2840 = vcombine.low %v2775, %v2791
        %v2841 = vcombine.high %v2775, %v2791
        %v2843 = vunpack.c.l.s4 1934713408
        %v2844 = vunpack.c.0.s8 %v2843
        %v2845 = vlaneseq
        %v2846 = vshrl.u32 %v2845, 7
        %v2847 = vsub.s32 %v2844, %v2846
        %v2848 = vrot.slane %v2840, %v2847
        %v2850 = vunpack.c.l.s4 1934713408
        %v2851 = vunpack.c.0.s8 %v2850
        %v2852 = vlaneseq
        %v2853 = vshrl.u32 %v2852, 7
        %v2854 = vsub.s32 %v2851, %v2853
        %v2855 = vrot.slane %v2841, %v2854
        %v2856 = vcombine.low %v2800, %v2832
        %v2857 = vcombine.high %v2800, %v2832
        %v2858 = vcombine.low %v2807, %v2839
        %v2859 = vcombine.high %v2807, %v2839
        %v2860 = vcombine.low %v2816, %v2848
        %v2861 = vcombine.high %v2816, %v2848
        %v2862 = vcombine.low %v2823, %v2855
        %v2863 = vcombine.high %v2823, %v2855
        %v2864 = vcombine.low %v2712, %v2716
        %v2865 = vcombine.high %v2712, %v2716
        %v2867 = vunpack.c.l.s4 1983009808
        %v2868 = vunpack.c.0.s8 %v2867
        %v2869 = vlaneseq
        %v2870 = vshrl.u32 %v2869, 7
        %v2871 = vsub.s32 %v2868, %v2870
        %v2872 = vrot.slane %v2864, %v2871
        %v2874 = vunpack.c.l.s4 1983009808
        %v2875 = vunpack.c.0.s8 %v2874
        %v2876 = vlaneseq
        %v2877 = vshrl.u32 %v2876, 7
        %v2878 = vsub.s32 %v2875, %v2877
        %v2879 = vrot.slane %v2865, %v2878
        %v2880 = vcombine.low %v2714, %v2718
        %v2881 = vcombine.high %v2714, %v2718
        %v2883 = vunpack.c.l.s4 1983009808
        %v2884 = vunpack.c.0.s8 %v2883
        %v2885 = vlaneseq
        %v2886 = vshrl.u32 %v2885, 7
        %v2887 = vsub.s32 %v2884, %v2886
        %v2888 = vrot.slane %v2880, %v2887
        %v2890 = vunpack.c.l.s4 1983009808
        %v2891 = vunpack.c.0.s8 %v2890
        %v2892 = vlaneseq
        %v2893 = vshrl.u32 %v2892, 7
        %v2894 = vsub.s32 %v2891, %v2893
        %v2895 = vrot.slane %v2881, %v2894
        %v2896 = vcombine.low %v2720, %v2724
        %v2897 = vcombine.high %v2720, %v2724
        %v2899 = vunpack.c.l.s4 1983009808
        %v2900 = vunpack.c.0.s8 %v2899
        %v2901 = vlaneseq
        %v2902 = vshrl.u32 %v2901, 7
        %v2903 = vsub.s32 %v2900, %v2902
        %v2904 = vrot.slane %v2896, %v2903
        %v2906 = vunpack.c.l.s4 1983009808
        %v2907 = vunpack.c.0.s8 %v2906
        %v2908 = vlaneseq
        %v2909 = vshrl.u32 %v2908, 7
        %v2910 = vsub.s32 %v2907, %v2909
        %v2911 = vrot.slane %v2897, %v2910
        %v2912 = vcombine.low %v2722, %v2726
        %v2913 = vcombine.high %v2722, %v2726
        %v2915 = vunpack.c.l.s4 1983009808
        %v2916 = vunpack.c.0.s8 %v2915
        %v2917 = vlaneseq
        %v2918 = vshrl.u32 %v2917, 7
        %v2919 = vsub.s32 %v2916, %v2918
        %v2920 = vrot.slane %v2912, %v2919
        %v2922 = vunpack.c.l.s4 1983009808
        %v2923 = vunpack.c.0.s8 %v2922
        %v2924 = vlaneseq
        %v2925 = vshrl.u32 %v2924, 7
        %v2926 = vsub.s32 %v2923, %v2925
        %v2927 = vrot.slane %v2913, %v2926
        %v2928 = vcombine.low %v2872, %v2888
        %v2929 = vcombine.high %v2872, %v2888
        %v2931 = vunpack.c.l.s4 1934713408
        %v2932 = vunpack.c.0.s8 %v2931
        %v2933 = vlaneseq
        %v2934 = vshrl.u32 %v2933, 7
        %v2935 = vsub.s32 %v2932, %v2934
        %v2936 = vrot.slane %v2928, %v2935
        %v2938 = vunpack.c.l.s4 1934713408
        %v2939 = vunpack.c.0.s8 %v2938
        %v2940 = vlaneseq
        %v2941 = vshrl.u32 %v2940, 7
        %v2942 = vsub.s32 %v2939, %v2941
        %v2943 = vrot.slane %v2929, %v2942
        %v2944 = vcombine.low %v2879, %v2895
        %v2945 = vcombine.high %v2879, %v2895
        %v2947 = vunpack.c.l.s4 1934713408
        %v2948 = vunpack.c.0.s8 %v2947
        %v2949 = vlaneseq
        %v2950 = vshrl.u32 %v2949, 7
        %v2951 = vsub.s32 %v2948, %v2950
        %v2952 = vrot.slane %v2944, %v2951
        %v2954 = vunpack.c.l.s4 1934713408
        %v2955 = vunpack.c.0.s8 %v2954
        %v2956 = vlaneseq
        %v2957 = vshrl.u32 %v2956, 7
        %v2958 = vsub.s32 %v2955, %v2957
        %v2959 = vrot.slane %v2945, %v2958
        %v2960 = vcombine.low %v2904, %v2920
        %v2961 = vcombine.high %v2904, %v2920
        %v2963 = vunpack.c.l.s4 1934713408
        %v2964 = vunpack.c.0.s8 %v2963
        %v2965 = vlaneseq
        %v2966 = vshrl.u32 %v2965, 7
        %v2967 = vsub.s32 %v2964, %v2966
        %v2968 = vrot.slane %v2960, %v2967
        %v2970 = vunpack.c.l.s4 1934713408
        %v2971 = vunpack.c.0.s8 %v2970
        %v2972 = vlaneseq
        %v2973 = vshrl.u32 %v2972, 7
        %v2974 = vsub.s32 %v2971, %v2973
        %v2975 = vrot.slane %v2961, %v2974
        %v2976 = vcombine.low %v2911, %v2927
        %v2977 = vcombine.high %v2911, %v2927
        %v2979 = vunpack.c.l.s4 1934713408
        %v2980 = vunpack.c.0.s8 %v2979
        %v2981 = vlaneseq
        %v2982 = vshrl.u32 %v2981, 7
        %v2983 = vsub.s32 %v2980, %v2982
        %v2984 = vrot.slane %v2976, %v2983
        %v2986 = vunpack.c.l.s4 1934713408
        %v2987 = vunpack.c.0.s8 %v2986
        %v2988 = vlaneseq
        %v2989 = vshrl.u32 %v2988, 7
        %v2990 = vsub.s32 %v2987, %v2989
        %v2991 = vrot.slane %v2977, %v2990
        %v2992 = vcombine.low %v2936, %v2968
        %v2993 = vcombine.high %v2936, %v2968
        %v2994 = vcombine.low %v2943, %v2975
        %v2995 = vcombine.high %v2943, %v2975
        %v2996 = vcombine.low %v2952, %v2984
        %v2997 = vcombine.high %v2952, %v2984
        %v2998 = vcombine.low %v2959, %v2991
        %v2999 = vcombine.high %v2959, %v2991
        %v3000 = vcombine.low %v2697, %v2701
        %v3001 = vcombine.high %v2697, %v2701
        %v3003 = vunpack.c.l.s4 1983009808
        %v3004 = vunpack.c.0.s8 %v3003
        %v3005 = vlaneseq
        %v3006 = vshrl.u32 %v3005, 7
        %v3007 = vsub.s32 %v3004, %v3006
        %v3008 = vrot.slane %v3000, %v3007
        %v3010 = vunpack.c.l.s4 1983009808
        %v3011 = vunpack.c.0.s8 %v3010
        %v3012 = vlaneseq
        %v3013 = vshrl.u32 %v3012, 7
        %v3014 = vsub.s32 %v3011, %v3013
        %v3015 = vrot.slane %v3001, %v3014
        %v3016 = vcombine.low %v2699, %v2703
        %v3017 = vcombine.high %v2699, %v2703
        %v3019 = vunpack.c.l.s4 1983009808
        %v3020 = vunpack.c.0.s8 %v3019
        %v3021 = vlaneseq
        %v3022 = vshrl.u32 %v3021, 7
        %v3023 = vsub.s32 %v3020, %v3022
        %v3024 = vrot.slane %v3016, %v3023
        %v3026 = vunpack.c.l.s4 1983009808
        %v3027 = vunpack.c.0.s8 %v3026
        %v3028 = vlaneseq
        %v3029 = vshrl.u32 %v3028, 7
        %v3030 = vsub.s32 %v3027, %v3029
        %v3031 = vrot.slane %v3017, %v3030
        %v3032 = vcombine.low %v2705, %v2709
        %v3033 = vcombine.high %v2705, %v2709
        %v3035 = vunpack.c.l.s4 1983009808
        %v3036 = vunpack.c.0.s8 %v3035
        %v3037 = vlaneseq
        %v3038 = vshrl.u32 %v3037, 7
        %v3039 = vsub.s32 %v3036, %v3038
        %v3040 = vrot.slane %v3032, %v3039
        %v3042 = vunpack.c.l.s4 1983009808
        %v3043 = vunpack.c.0.s8 %v3042
        %v3044 = vlaneseq
        %v3045 = vshrl.u32 %v3044, 7
        %v3046 = vsub.s32 %v3043, %v3045
        %v3047 = vrot.slane %v3033, %v3046
        %v3048 = vcombine.low %v2707, %v2711
        %v3049 = vcombine.high %v2707, %v2711
        %v3051 = vunpack.c.l.s4 1983009808
        %v3052 = vunpack.c.0.s8 %v3051
        %v3053 = vlaneseq
        %v3054 = vshrl.u32 %v3053, 7
        %v3055 = vsub.s32 %v3052, %v3054
        %v3056 = vrot.slane %v3048, %v3055
        %v3058 = vunpack.c.l.s4 1983009808
        %v3059 = vunpack.c.0.s8 %v3058
        %v3060 = vlaneseq
        %v3061 = vshrl.u32 %v3060, 7
        %v3062 = vsub.s32 %v3059, %v3061
        %v3063 = vrot.slane %v3049, %v3062
        %v3064 = vcombine.low %v3008, %v3024
        %v3065 = vcombine.high %v3008, %v3024
        %v3067 = vunpack.c.l.s4 1934713408
        %v3068 = vunpack.c.0.s8 %v3067
        %v3069 = vlaneseq
        %v3070 = vshrl.u32 %v3069, 7
        %v3071 = vsub.s32 %v3068, %v3070
        %v3072 = vrot.slane %v3064, %v3071
        %v3074 = vunpack.c.l.s4 1934713408
        %v3075 = vunpack.c.0.s8 %v3074
        %v3076 = vlaneseq
        %v3077 = vshrl.u32 %v3076, 7
        %v3078 = vsub.s32 %v3075, %v3077
        %v3079 = vrot.slane %v3065, %v3078
        %v3080 = vcombine.low %v3015, %v3031
        %v3081 = vcombine.high %v3015, %v3031
        %v3083 = vunpack.c.l.s4 1934713408
        %v3084 = vunpack.c.0.s8 %v3083
        %v3085 = vlaneseq
        %v3086 = vshrl.u32 %v3085, 7
        %v3087 = vsub.s32 %v3084, %v3086
        %v3088 = vrot.slane %v3080, %v3087
        %v3090 = vunpack.c.l.s4 1934713408
        %v3091 = vunpack.c.0.s8 %v3090
        %v3092 = vlaneseq
        %v3093 = vshrl.u32 %v3092, 7
        %v3094 = vsub.s32 %v3091, %v3093
        %v3095 = vrot.slane %v3081, %v3094
        %v3096 = vcombine.low %v3040, %v3056
        %v3097 = vcombine.high %v3040, %v3056
        %v3099 = vunpack.c.l.s4 1934713408
        %v3100 = vunpack.c.0.s8 %v3099
        %v3101 = vlaneseq
        %v3102 = vshrl.u32 %v3101, 7
        %v3103 = vsub.s32 %v3100, %v3102
        %v3104 = vrot.slane %v3096, %v3103
        %v3106 = vunpack.c.l.s4 1934713408
        %v3107 = vunpack.c.0.s8 %v3106
        %v3108 = vlaneseq
        %v3109 = vshrl.u32 %v3108, 7
        %v3110 = vsub.s32 %v3107, %v3109
        %v3111 = vrot.slane %v3097, %v3110
        %v3112 = vcombine.low %v3047, %v3063
        %v3113 = vcombine.high %v3047, %v3063
        %v3115 = vunpack.c.l.s4 1934713408
        %v3116 = vunpack.c.0.s8 %v3115
        %v3117 = vlaneseq
        %v3118 = vshrl.u32 %v3117, 7
        %v3119 = vsub.s32 %v3116, %v3118
        %v3120 = vrot.slane %v3112, %v3119
        %v3122 = vunpack.c.l.s4 1934713408
        %v3123 = vunpack.c.0.s8 %v3122
        %v3124 = vlaneseq
        %v3125 = vshrl.u32 %v3124, 7
        %v3126 = vsub.s32 %v3123, %v3125
        %v3127 = vrot.slane %v3113, %v3126
        %v3128 = vcombine.low %v3072, %v3104
        %v3129 = vcombine.high %v3072, %v3104
        %v3130 = vcombine.low %v3079, %v3111
        %v3131 = vcombine.high %v3079, %v3111
        %v3132 = vcombine.low %v3088, %v3120
        %v3133 = vcombine.high %v3088, %v3120
        %v3134 = vcombine.low %v3095, %v3127
        %v3135 = vcombine.high %v3095, %v3127
        %v3136 = vcombine.low %v2713, %v2717
        %v3137 = vcombine.high %v2713, %v2717
        %v3139 = vunpack.c.l.s4 1983009808
        %v3140 = vunpack.c.0.s8 %v3139
        %v3141 = vlaneseq
        %v3142 = vshrl.u32 %v3141, 7
        %v3143 = vsub.s32 %v3140, %v3142
        %v3144 = vrot.slane %v3136, %v3143
        %v3146 = vunpack.c.l.s4 1983009808
        %v3147 = vunpack.c.0.s8 %v3146
        %v3148 = vlaneseq
        %v3149 = vshrl.u32 %v3148, 7
        %v3150 = vsub.s32 %v3147, %v3149
        %v3151 = vrot.slane %v3137, %v3150
        %v3152 = vcombine.low %v2715, %v2719
        %v3153 = vcombine.high %v2715, %v2719
        %v3155 = vunpack.c.l.s4 1983009808
        %v3156 = vunpack.c.0.s8 %v3155
        %v3157 = vlaneseq
        %v3158 = vshrl.u32 %v3157, 7
        %v3159 = vsub.s32 %v3156, %v3158
        %v3160 = vrot.slane %v3152, %v3159
        %v3162 = vunpack.c.l.s4 1983009808
        %v3163 = vunpack.c.0.s8 %v3162
        %v3164 = vlaneseq
        %v3165 = vshrl.u32 %v3164, 7
        %v3166 = vsub.s32 %v3163, %v3165
        %v3167 = vrot.slane %v3153, %v3166
        %v3168 = vcombine.low %v2721, %v2725
        %v3169 = vcombine.high %v2721, %v2725
        %v3171 = vunpack.c.l.s4 1983009808
        %v3172 = vunpack.c.0.s8 %v3171
        %v3173 = vlaneseq
        %v3174 = vshrl.u32 %v3173, 7
        %v3175 = vsub.s32 %v3172, %v3174
        %v3176 = vrot.slane %v3168, %v3175
        %v3178 = vunpack.c.l.s4 1983009808
        %v3179 = vunpack.c.0.s8 %v3178
        %v3180 = vlaneseq
        %v3181 = vshrl.u32 %v3180, 7
        %v3182 = vsub.s32 %v3179, %v3181
        %v3183 = vrot.slane %v3169, %v3182
        %v3184 = vcombine.low %v2723, %v2727
        %v3185 = vcombine.high %v2723, %v2727
        %v3187 = vunpack.c.l.s4 1983009808
        %v3188 = vunpack.c.0.s8 %v3187
        %v3189 = vlaneseq
        %v3190 = vshrl.u32 %v3189, 7
        %v3191 = vsub.s32 %v3188, %v3190
        %v3192 = vrot.slane %v3184, %v3191
        %v3194 = vunpack.c.l.s4 1983009808
        %v3195 = vunpack.c.0.s8 %v3194
        %v3196 = vlaneseq
        %v3197 = vshrl.u32 %v3196, 7
        %v3198 = vsub.s32 %v3195, %v3197
        %v3199 = vrot.slane %v3185, %v3198
        %v3200 = vcombine.low %v3144, %v3160
        %v3201 = vcombine.high %v3144, %v3160
        %v3203 = vunpack.c.l.s4 1934713408
        %v3204 = vunpack.c.0.s8 %v3203
        %v3205 = vlaneseq
        %v3206 = vshrl.u32 %v3205, 7
        %v3207 = vsub.s32 %v3204, %v3206
        %v3208 = vrot.slane %v3200, %v3207
        %v3210 = vunpack.c.l.s4 1934713408
        %v3211 = vunpack.c.0.s8 %v3210
        %v3212 = vlaneseq
        %v3213 = vshrl.u32 %v3212, 7
        %v3214 = vsub.s32 %v3211, %v3213
        %v3215 = vrot.slane %v3201, %v3214
        %v3216 = vcombine.low %v3151, %v3167
        %v3217 = vcombine.high %v3151, %v3167
        %v3219 = vunpack.c.l.s4 1934713408
        %v3220 = vunpack.c.0.s8 %v3219
        %v3221 = vlaneseq
        %v3222 = vshrl.u32 %v3221, 7
        %v3223 = vsub.s32 %v3220, %v3222
        %v3224 = vrot.slane %v3216, %v3223
        %v3226 = vunpack.c.l.s4 1934713408
        %v3227 = vunpack.c.0.s8 %v3226
        %v3228 = vlaneseq
        %v3229 = vshrl.u32 %v3228, 7
        %v3230 = vsub.s32 %v3227, %v3229
        %v3231 = vrot.slane %v3217, %v3230
        %v3232 = vcombine.low %v3176, %v3192
        %v3233 = vcombine.high %v3176, %v3192
        %v3235 = vunpack.c.l.s4 1934713408
        %v3236 = vunpack.c.0.s8 %v3235
        %v3237 = vlaneseq
        %v3238 = vshrl.u32 %v3237, 7
        %v3239 = vsub.s32 %v3236, %v3238
        %v3240 = vrot.slane %v3232, %v3239
        %v3242 = vunpack.c.l.s4 1934713408
        %v3243 = vunpack.c.0.s8 %v3242
        %v3244 = vlaneseq
        %v3245 = vshrl.u32 %v3244, 7
        %v3246 = vsub.s32 %v3243, %v3245
        %v3247 = vrot.slane %v3233, %v3246
        %v3248 = vcombine.low %v3183, %v3199
        %v3249 = vcombine.high %v3183, %v3199
        %v3251 = vunpack.c.l.s4 1934713408
        %v3252 = vunpack.c.0.s8 %v3251
        %v3253 = vlaneseq
        %v3254 = vshrl.u32 %v3253, 7
        %v3255 = vsub.s32 %v3252, %v3254
        %v3256 = vrot.slane %v3248, %v3255
        %v3258 = vunpack.c.l.s4 1934713408
        %v3259 = vunpack.c.0.s8 %v3258
        %v3260 = vlaneseq
        %v3261 = vshrl.u32 %v3260, 7
        %v3262 = vsub.s32 %v3259, %v3261
        %v3263 = vrot.slane %v3249, %v3262
        %v3264 = vcombine.low %v3208, %v3240
        %v3265 = vcombine.high %v3208, %v3240
        %v3266 = vcombine.low %v3215, %v3247
        %v3267 = vcombine.high %v3215, %v3247
        %v3268 = vcombine.low %v3224, %v3256
        %v3269 = vcombine.high %v3224, %v3256
        %v3270 = vcombine.low %v3231, %v3263
        %v3271 = vcombine.high %v3231, %v3263
        %3274 = vrot.lane.b32.xlu0 %v2857, 8
        %v3275 = vpop.permute.xlu0 %3274
        %3276 = vrot.lane.b32.xlu0 %v2993, 8
        %v3277 = vpop.permute.xlu0 %3276
        %3282 = vrot.lane.b32.xlu0 %v2858, 16
        %v3283 = vpop.permute.xlu0 %3282
        %3284 = vrot.lane.b32.xlu0 %v2994, 16
        %v3285 = vpop.permute.xlu0 %3284
        %3290 = vrot.lane.b32.xlu0 %v2859, 24
        %v3291 = vpop.permute.xlu0 %3290
        %3292 = vrot.lane.b32.xlu0 %v2995, 24
        %v3293 = vpop.permute.xlu0 %3292
        %3298 = vrot.lane.b32.xlu0 %v2860, 32
        %v3299 = vpop.permute.xlu0 %3298
        %3300 = vrot.lane.b32.xlu0 %v2996, 32
        %v3301 = vpop.permute.xlu0 %3300
        %3306 = vrot.lane.b32.xlu0 %v2861, 40
        %v3307 = vpop.permute.xlu0 %3306
        %3308 = vrot.lane.b32.xlu0 %v2997, 40
        %v3309 = vpop.permute.xlu0 %3308
        %3314 = vrot.lane.b32.xlu0 %v2862, 48
        %v3315 = vpop.permute.xlu0 %3314
        %3316 = vrot.lane.b32.xlu0 %v2998, 48
        %v3317 = vpop.permute.xlu0 %3316
        %3322 = vrot.lane.b32.xlu0 %v2863, 56
        %v3323 = vpop.permute.xlu0 %3322
        %3324 = vrot.lane.b32.xlu0 %v2999, 56
        %v3325 = vpop.permute.xlu0 %3324
        %3330 = vrot.lane.b32.xlu0 %v3128, 64
        %v3331 = vpop.permute.xlu0 %3330
        %3332 = vrot.lane.b32.xlu0 %v3264, 64
        %v3333 = vpop.permute.xlu0 %3332
        %3338 = vrot.lane.b32.xlu0 %v3129, 72
        %v3339 = vpop.permute.xlu0 %3338
        %3340 = vrot.lane.b32.xlu0 %v3265, 72
        %v3341 = vpop.permute.xlu0 %3340
        %3346 = vrot.lane.b32.xlu0 %v3130, 80
        %v3347 = vpop.permute.xlu0 %3346
        %3348 = vrot.lane.b32.xlu0 %v3266, 80
        %v3349 = vpop.permute.xlu0 %3348
        %3354 = vrot.lane.b32.xlu0 %v3131, 88
        %v3355 = vpop.permute.xlu0 %3354
        %3356 = vrot.lane.b32.xlu0 %v3267, 88
        %v3357 = vpop.permute.xlu0 %3356
        %3362 = vrot.lane.b32.xlu0 %v3132, 96
        %v3363 = vpop.permute.xlu0 %3362
        %3364 = vrot.lane.b32.xlu0 %v3268, 96
        %v3365 = vpop.permute.xlu0 %3364
        %3370 = vrot.lane.b32.xlu0 %v3133, 104
        %v3371 = vpop.permute.xlu0 %3370
        %3372 = vrot.lane.b32.xlu0 %v3269, 104
        %v3373 = vpop.permute.xlu0 %3372
        %3378 = vrot.lane.b32.xlu0 %v3134, 112
        %v3379 = vpop.permute.xlu0 %3378
        %3380 = vrot.lane.b32.xlu0 %v3270, 112
        %v3381 = vpop.permute.xlu0 %3380
        %3386 = vrot.lane.b32.xlu0 %v3135, 120
        %v3387 = vpop.permute.xlu0 %3386
        %3388 = vrot.lane.b32.xlu0 %v3271, 120
        %v3389 = vpop.permute.xlu0 %3388
        %v3392 = vsel %vm400, %v2856, %v3275
        %v3393 = vsel %vm400, %v2992, %v3277
        %vm3394 = vcmask 130048
        %v3395 = vsel %vm3394, %v3392, %v3283
        %v3396 = vsel %vm3394, %v3393, %v3285
        %vm3397 = vcmask 195584
        %v3398 = vsel %vm3397, %v3395, %v3291
        %v3399 = vsel %vm3397, %v3396, %v3293
        %v3400 = vsel %vm758, %v3398, %v3299
        %v3401 = vsel %vm758, %v3399, %v3301
        %vm3402 = vcmask 326656
        %v3403 = vsel %vm3402, %v3400, %v3307
        %v3404 = vsel %vm3402, %v3401, %v3309
        %vm3405 = vcmask 392192
        %v3406 = vsel %vm3405, %v3403, %v3315
        %v3407 = vsel %vm3405, %v3404, %v3317
        %vm3408 = vcmask 457728
        %v3409 = vsel %vm3408, %v3406, %v3323
        %v3410 = vsel %vm3408, %v3407, %v3325
        %vm3411 = vcmask 523264
        %v3412 = vsel %vm3411, %v3409, %v3331
        %v3413 = vsel %vm3411, %v3410, %v3333
        %v3414 = vsel %vm1080, %v3412, %v3339
        %v3415 = vsel %vm1080, %v3413, %v3341
        %vm3416 = vcmask 654336
        %v3417 = vsel %vm3416, %v3414, %v3347
        %v3418 = vsel %vm3416, %v3415, %v3349
        %vm3419 = vcmask 719872
        %v3420 = vsel %vm3419, %v3417, %v3355
        %v3421 = vsel %vm3419, %v3418, %v3357
        %vm3422 = vcmask 785408
        %v3423 = vsel %vm3422, %v3420, %v3363
        %v3424 = vsel %vm3422, %v3421, %v3365
        %vm3425 = vcmask 850944
        %v3426 = vsel %vm3425, %v3423, %v3371
        %v3427 = vsel %vm3425, %v3424, %v3373
        %vm3428 = vcmask 916480
        %v3429 = vsel %vm3428, %v3426, %v3379
        %v3430 = vsel %vm3428, %v3427, %v3381
        %vm3431 = vcmask 982016
        %v3432 = vsel %vm3431, %v3429, %v3387
        %v3433 = vsel %vm3431, %v3430, %v3389
        %3434 = vst [vmem:[%s244] sm:$0xff] %v3432
        %3435 = vst [vmem:[%s244 + $0x8] sm:$0xff] %v3433
        %s3436 = sand.u32 %s159, 1
        %s3437 = scalar_lea.sflag [#allocation4], %s3436
        %s3438 = sand.u32 %s159, 1
        %s3439 = smul.addr %s3438, 16
        %s3440 = scalar_lea.vmem [#allocation3], %s3439
        // Predicated region
        $region45: #{tpu_custom_call.1} parent=43 // pred_check
          %p3441 = pneg %p169
        $region46: #{tpu_custom_call.1} parent=43 // pred_check_branch
          %3443 = sbr.rel (%p3441) target = $region48
        $region47: #{tpu_custom_call.1} parent=43 // pred_region
          %s3445 = ssub.s32 256, 256
          %3446 = vsyncadd %s3437, %s3445
          %s3447 = smul.addr %s20, 2
          %s3448 = smul.addr %s3447, 128
          %s3449 = scalar_lea.hbm %s6, %s3448
          %s3450 = sshll.u32 %s3440, 4
          %s3451 = int_to_ptr.vmem [resolvable:$true] %s3450
          %3456 = dma.vmem_to_hbm [thread:$0]  %s3451, 256, %s3449, %s3437, 128, 128, 8
        $region48: #{tpu_custom_call.1} parent=43 // pred_fallthru
          _
      $region44: #{tpu_custom_call.1} parent=5 // pred_fallthru
        _
      %p3457 = scmp.le.s32.totalorder 2, %s15
      // Predicated region
      $region49: #{tpu_custom_call.1} parent=5 // pred_check
        %p3458 = pneg %p3457
      $region50: #{tpu_custom_call.1} parent=5 // pred_check_branch
        %3460 = sbr.rel (%p3458) target = $region52
      $region51: #{tpu_custom_call.1} parent=5 // pred_region
        %s3461 = ssub.s32 %s15, 2
        // Predicated region
        $region53: #{tpu_custom_call.1} parent=51 // pred_check
          %p3462 = pneg %p175
        $region54: #{tpu_custom_call.1} parent=51 // pred_check_branch
          %3464 = sbr.rel (%p3462) target = $region56
        $region55: #{tpu_custom_call.1} parent=51 // pred_region
          %s3465 = sand.u32 %s160, 1
          %s3466 = scalar_lea.sflag [#allocation4], %s3465
          %s3467 = sand.u32 %s160, 1
          %s3468 = smul.addr %s3467, 16
          %s3469 = scalar_lea.vmem [#allocation3], %s3468
          %3470 = dma.done %s3466, 256
        $region56: #{tpu_custom_call.1} parent=51 // pred_fallthru
          _
      $region52: #{tpu_custom_call.1} parent=5 // pred_fallthru
        _
    $region6: #{tpu_custom_call.1} parent=1 // loop_footer
      %s19 = sadd.s32 1, %s15
    $region7: #{tpu_custom_call.1} parent=1 // loop_footer_branch
      %14 = sbr.rel target = $region3
    $region8: #{tpu_custom_call.1} parent=1 // loop_exit
      _
    %3471 = vsyncpa [#allocation4], 1
    %s3472 = scalar_lea.sflag [#allocation4], 1
    %3473 = vsyncpa %s3472, 1

</llo_original>
